<compile_context>
chip_gen: v5e
topology: v5e:2x2
jax: 0.10.0
libtpu: 0.0.40
codegen_flags: <defaults>
</compile_context>

<pallas_src>
import functools

import jax
import jax.numpy as jnp
from jax import lax
from jax.experimental import pallas as pl
from jax.experimental.pallas import tpu as pltpu

EPS = 1e-5  # nn.BatchNorm2d default


# ---------------------------------------------------------------------------
# Kernels
# ---------------------------------------------------------------------------
def _matmul_stats_kernel(x_ref, w_ref, sums_ref):
    """Pass 1: per-channel sum / sum-of-squares of (x @ w), accumulated across M tiles.

    x_ref: (TM, Kp) bf16, w_ref: (Kp, Cp) bf16,
    sums_ref: (8, Cp) f32 (row 0 = sum, row 1 = sum of squares) -- revisited across M.
    """
    y = jnp.dot(x_ref[...], w_ref[...], preferred_element_type=jnp.float32)

    @pl.when(pl.program_id(0) == 0)
    def _():
        sums_ref[...] = jnp.zeros_like(sums_ref)

    sums_ref[0:1, :] = sums_ref[0:1, :] + jnp.sum(y, axis=0, keepdims=True)
    sums_ref[1:2, :] = sums_ref[1:2, :] + jnp.sum(y * y, axis=0, keepdims=True)


def _bn_scale_bias(sums_ref, gb_ref, inv_count):
    """Fold batch stats + gamma/beta into per-channel (scale, bias). All f32."""
    mean = sums_ref[0:1, :] * inv_count
    ex2 = sums_ref[1:2, :] * inv_count
    var = ex2 - mean * mean
    inv = lax.rsqrt(var + EPS)          # EUP
    scale = gb_ref[0:1, :] * inv        # gamma * rsqrt(var+eps)
    bias = gb_ref[1:2, :] - mean * scale
    return scale, bias


def _matmul_bn_act_kernel(x_ref, w_ref, sums_ref, gb_ref, o_ref, *, inv_count, relu):
    """Pass 2: y = x @ w, then y*scale + bias (+ ReLU); write stage output."""
    y = jnp.dot(x_ref[...], w_ref[...], preferred_element_type=jnp.float32)
    scale, bias = _bn_scale_bias(sums_ref, gb_ref, inv_count)
    out = y * scale + bias
    if relu:
        out = jnp.maximum(out, 0.0)
    o_ref[...] = out.astype(o_ref.dtype)


def _matmul_bn_add_relu_kernel(x_ref, w_ref, sums_ref, gb_ref, r_ref, o_ref, *, inv_count):
    """Pass 2 (final stage): matmul + BN + residual add + ReLU, fused."""
    y = jnp.dot(x_ref[...], w_ref[...], preferred_element_type=jnp.float32)
    scale, bias = _bn_scale_bias(sums_ref, gb_ref, inv_count)
    out = y * scale + bias + r_ref[...]
    o_ref[...] = jnp.maximum(out, 0.0).astype(o_ref.dtype)


# ---------------------------------------------------------------------------
# Host-side helpers
# ---------------------------------------------------------------------------
def _round_up(x, m):
    return (x + m - 1) // m * m


def _pad2d(a, rows, cols):
    r, c = a.shape
    return jnp.pad(a, ((0, rows - r), (0, cols - c)))


def _im2col_nhwc(x, k, stride, pad):
    """x: (N, H, W, C) -> patches (N*Ho*Wo, k*k*C); column index = (dy*k+dx)*C + c."""
    N, H, W, C = x.shape
    Ho = (H + 2 * pad - k) // stride + 1
    Wo = (W + 2 * pad - k) // stride + 1
    xp = jnp.pad(x, ((0, 0), (pad, pad), (pad, pad), (0, 0)))
    taps = []
    for dy in range(k):
        for dx in range(k):
            taps.append(xp[:, dy:dy + stride * Ho:stride, dx:dx + stride * Wo:stride, :])
    patches = jnp.concatenate(taps, axis=-1).reshape(N * Ho * Wo, k * k * C)
    return patches, Ho, Wo


def _conv_stage(x_slab, w_flat, gamma, beta, *, relu, residual=None,
                out_dtype=jnp.bfloat16, block_m=512):
    """One conv+BN(+residual)(+ReLU) stage as two tiled Pallas calls.

    x_slab: (M, K) im2col/slab, w_flat: (K, C_out), gamma/beta: (C_out,).
    residual: optional (M, C_out) f32 (fused add before the final ReLU).
    Returns (M, C_out) in out_dtype.
    """
    M, K = x_slab.shape
    C_out = w_flat.shape[1]
    Kp = _round_up(K, 128)                 # MXU-contraction aligned
    Cp = _round_up(C_out, 128)             # lane-dense output channels
    tm = min(block_m, _round_up(M, 8))
    Mp = _round_up(M, tm)
    grid = (Mp // tm,)

    x_p = _pad2d(x_slab, Mp, Kp).astype(jnp.bfloat16)          # bf16 MXU feed
    w_p = _pad2d(w_flat.astype(jnp.float32), Kp, Cp).astype(jnp.bfloat16)
    gb_p = _pad2d(jnp.stack([gamma.astype(jnp.float32),         # row 0: gamma
                             beta.astype(jnp.float32)], axis=0),  # row 1: beta
                  8, Cp)

    vmem_limit = 64 * 1024 * 1024
    matmul_flops = 2 * Mp * Kp * Cp

    x_spec = pl.BlockSpec((tm, Kp), lambda m: (m, 0))
    w_spec = pl.BlockSpec((Kp, Cp), lambda m: (0, 0))
    row_spec = pl.BlockSpec((8, Cp), lambda m: (0, 0))
    tile_spec = pl.BlockSpec((tm, Cp), lambda m: (m, 0))

    # ---- pass 1: per-channel stats (cross-tile reduction -> "arbitrary") ----
    sums = pl.pallas_call(
        _matmul_stats_kernel,
        out_shape=jax.ShapeDtypeStruct((8, Cp), jnp.float32),
        grid_spec=pltpu.PrefetchScalarGridSpec(
            num_scalar_prefetch=0,
            grid=grid,
            in_specs=[x_spec, w_spec],
            out_specs=row_spec,
        ),
        compiler_params=pltpu.CompilerParams(
            dimension_semantics=("arbitrary",),
            vmem_limit_bytes=vmem_limit),
        cost_estimate=pl.CostEstimate(
            flops=matmul_flops, transcendentals=0,
            bytes_accessed=x_p.size * 2 + w_p.size * 2 + 8 * Cp * 4),
    )(x_p, w_p)

    # ---- pass 2: matmul recompute + BN (+ residual) (+ ReLU); tiles independent ----
    inv_count = 1.0 / float(M)   # real rows only; zero-padded rows contribute 0 to sums
    out_bytes = Mp * Cp * jnp.dtype(out_dtype).itemsize

    if residual is None:
        kern = functools.partial(_matmul_bn_act_kernel, inv_count=inv_count, relu=relu)
        inputs = (x_p, w_p, sums, gb_p)
        in_specs = [x_spec, w_spec, row_spec, row_spec]
        res_bytes = 0
    else:
        r_p = _pad2d(residual.astype(jnp.float32), Mp, Cp)
        kern = functools.partial(_matmul_bn_add_relu_kernel, inv_count=inv_count)
        inputs = (x_p, w_p, sums, gb_p, r_p)
        in_specs = [x_spec, w_spec, row_spec, row_spec, tile_spec]
        res_bytes = r_p.size * 4

    out = pl.pallas_call(
        kern,
        out_shape=jax.ShapeDtypeStruct((Mp, Cp), out_dtype),
        grid_spec=pltpu.PrefetchScalarGridSpec(
            num_scalar_prefetch=0,
            grid=grid,
            in_specs=in_specs,
            out_specs=tile_spec,
        ),
        compiler_params=pltpu.CompilerParams(
            dimension_semantics=("parallel",),
            vmem_limit_bytes=vmem_limit),
        cost_estimate=pl.CostEstimate(
            flops=matmul_flops + 6 * Mp * Cp,
            transcendentals=Cp,
            bytes_accessed=x_p.size * 2 + w_p.size * 2 + res_bytes + out_bytes),
    )(*inputs)

    return out[:M, :C_out]


# ---------------------------------------------------------------------------
# Bottleneck forward (downsample=None, use_wave_in=False)
# ---------------------------------------------------------------------------
def bottleneck_forward(x, params, *, stride=1, block_m=512):
    """x: (N, inplanes, H, W) f32 NCHW. Returns (N, planes*4, H, W) f32 NCHW."""
    assert stride == 1, "downsample branch not implemented; this config uses identity skip"
    N, C_in, H, W = x.shape
    w1, g1, b1 = params["w1"], params["g1"], params["b1"]
    w2, g2, b2 = params["w2"], params["g2"], params["b2"]
    w3, g3, b3 = params["w3"], params["g3"], params["b3"]
    planes = w1.shape[0]
    C_out = w3.shape[0]
    assert C_in == C_out, "identity skip requires inplanes == planes * 4"

    # NHWC slab end-to-end (channels on the lane axis).
    x_slab = jnp.transpose(x, (0, 2, 3, 1)).reshape(N * H * W, C_in)

    # conv1: 1x1 -> BN -> ReLU   (1x1 conv == plain (M, C) matmul; no im2col)
    w1_flat = w1.reshape(planes, C_in).T                       # (C_in, planes)
    out1 = _conv_stage(x_slab, w1_flat, g1, b1, relu=True, block_m=block_m)   # bf16

    # conv2: 3x3, stride=s, pad=1 -> BN -> ReLU
    out1_nhwc = out1.reshape(N, H, W, planes)
    patches, Ho, Wo = _im2col_nhwc(out1_nhwc, 3, stride, 1)    # (M2, 9*planes) bf16
    w2_flat = jnp.transpose(w2, (2, 3, 1, 0)).reshape(9 * planes, planes)
    out2 = _conv_stage(patches, w2_flat, g2, b2, relu=True, block_m=block_m)  # bf16

    # conv3: 1x1 -> BN ; fused residual add + ReLU (f32 output)
    w3_flat = w3.reshape(C_out, planes).T                      # (planes, C_out)
    out3 = _conv_stage(out2, w3_flat, g3, b3, relu=True, residual=x_slab,
                       out_dtype=jnp.float32, block_m=block_m)

    return out3.reshape(N, Ho, Wo, C_out).transpose(0, 3, 1, 2)


# ---------------------------------------------------------------------------
# Pure-JAX reference (dtype-matched: bf16 at conv inputs, f32 accumulation/epilogue)
# ---------------------------------------------------------------------------
def _bf16_round(a):
    return a.astype(jnp.bfloat16).astype(jnp.float32)


def _conv_ref(x, w, stride=1, pad=0):
    return lax.conv_general_dilated(
        _bf16_round(x).astype(jnp.bfloat16), _bf16_round(w).astype(jnp.bfloat16),
        window_strides=(stride, stride),
        padding=[(pad, pad), (pad, pad)],
        dimension_numbers=("NCHW", "OIHW", "NCHW"),
        preferred_element_type=jnp.float32)


def _bn_ref(y, gamma, beta):
    mean = jnp.mean(y, axis=(0, 2, 3), keepdims=True)
    var = jnp.mean((y - mean) ** 2, axis=(0, 2, 3), keepdims=True)
    return ((y - mean) * lax.rsqrt(var + EPS) * gamma.reshape(1, -1, 1, 1)
            + beta.reshape(1, -1, 1, 1))


def bottleneck_reference(x, params, *, stride=1):
    o = jnp.maximum(_bn_ref(_conv_ref(x, params["w1"]), params["g1"], params["b1"]), 0.0)
    o = jnp.maximum(_bn_ref(_conv_ref(o, params["w2"], stride, 1), params["g2"], params["b2"]), 0.0)
    o = _bn_ref(_conv_ref(o, params["w3"]), params["g3"], params["b3"])
    return jnp.maximum(o + x, 0.0)


# ---------------------------------------------------------------------------
if __name__ == "__main__":
    key = jax.random.PRNGKey(0)
    ks = jax.random.split(key, 10)

    # Small Bottleneck: N=2, planes=4, inplanes=planes*4=16, H=W=16, stride=1.
    N, planes, H, W = 2, 4, 16, 16
    inplanes = planes * 4

    def kaiming(k, shape):
        fan_in = shape[1] * shape[2] * shape[3]
        return jax.random.normal(k, shape, jnp.float32) * (2.0 / fan_in) ** 0.5

    x = jax.random.normal(ks[0], (N, inplanes, H, W), dtype=jnp.float32)
    params = {
        "w1": kaiming(ks[1], (planes, inplanes, 1, 1)),
        "g1": 1.0 + 0.1 * jax.random.normal(ks[2], (planes,), jnp.float32),
        "b1": 0.05 * jax.random.normal(ks[3], (planes,), jnp.float32),
        "w2": kaiming(ks[4], (planes, planes, 3, 3)),
        "g2": 1.0 + 0.1 * jax.random.normal(ks[5], (planes,), jnp.float32),
        "b2": 0.05 * jax.random.normal(ks[6], (planes,), jnp.float32),
        "w3": kaiming(ks[7], (planes * 4, planes, 1, 1)),
        "g3": 1.0 + 0.1 * jax.random.normal(ks[8], (planes * 4,), jnp.float32),
        "b3": 0.05 * jax.random.normal(ks[9], (planes * 4,), jnp.float32),
    }

    # block_m=128 => 4 M-tiles on M=512, exercising cross-tile BN stat accumulation.
    fwd = jax.jit(lambda xx, pp: bottleneck_forward(xx, pp, stride=1, block_m=128))
    out = jax.block_until_ready(fwd(x, params))

    ref = bottleneck_reference(x, params, stride=1)
    assert out.shape == (N, planes * 4, H, W)
    max_err = float(jnp.max(jnp.abs(out - ref)))
    assert jnp.allclose(out, ref, atol=2e-2, rtol=2e-2), max_err

    print("KERNEL_OK")
</pallas_src>

<mosaic_0001>
module attributes {stable_mosaic.version = 11 : i64} {
  func.func @_matmul_stats_kernel(%arg0: i32, %arg1: memref<128x128xbf16, #tpu.memory_space<vmem>>, %arg2: memref<128x128xbf16, #tpu.memory_space<vmem>>, %arg3: memref<8x128xf32, #tpu.memory_space<vmem>>) attributes {dimension_semantics = [#tpu.dimension_semantics<arbitrary>], iteration_bounds = array<i64: 4>, scalar_prefetch = 0 : i64, scratch_operands = 0 : i64, tpu.core_type = #tpu.core_type<tc>, window_params = [{transform_indices = @transform_0, window_bounds = array<i64: 128, 128>}, {pipeline_mode = #tpu.pipeline_mode<synchronous>, transform_indices = @transform_1, window_bounds = array<i64: 128, 128>}, {pipeline_mode = #tpu.pipeline_mode<synchronous>, transform_indices = @transform_2, window_bounds = array<i64: 8, 128>}]} {
    %c0 = arith.constant 0 : index
    %c0_0 = arith.constant 0 : index
    %0 = vector.load %arg1[%c0, %c0_0] : memref<128x128xbf16, #tpu.memory_space<vmem>>, vector<128x128xbf16>
    %c0_1 = arith.constant 0 : index
    %c0_2 = arith.constant 0 : index
    %1 = vector.load %arg2[%c0_1, %c0_2] : memref<128x128xbf16, #tpu.memory_space<vmem>>, vector<128x128xbf16>
    %cst = arith.constant dense<0.000000e+00> : vector<128x128xf32>
    %2 = tpu.matmul %0, %1, %cst {dimension_numbers = #tpu.dot_dimension_numbers<[1], [0], [0], [1], [0, 0, 1, 1], [], []>} : vector<128x128xbf16>, vector<128x128xbf16>, vector<128x128xf32> -> vector<128x128xf32>
    %c0_i32 = arith.constant 0 : i32
    %3 = arith.cmpi eq, %arg0, %c0_i32 : i32
    %4 = arith.extui %3 : i1 to i32
    %c0_i32_3 = arith.constant 0 : i32
    %5 = arith.cmpi ne, %4, %c0_i32_3 : i32
    scf.if %5 {
      %cst_13 = arith.constant 0.000000e+00 : f32
      %17 = vector.broadcast %cst_13 : f32 to vector<8x128xf32>
      %c0_14 = arith.constant 0 : index
      %c0_15 = arith.constant 0 : index
      %18 = vector.load %arg3[%c0_14, %c0_15] : memref<8x128xf32, #tpu.memory_space<vmem>>, vector<8x128xf32>
      tpu.vector_store %arg3[%c0_14, %c0_15], %17 {strides = array<i32>} : memref<8x128xf32, #tpu.memory_space<vmem>>, vector<8x128xf32>,
    } else {
    }
    %c0_4 = arith.constant 0 : index
    %c0_5 = arith.constant 0 : index
    %6 = vector.load %arg3[%c0_4, %c0_5] : memref<8x128xf32, #tpu.memory_space<vmem>>, vector<1x128xf32>
    %cst_6 = arith.constant dense<0.000000e+00> : vector<128xf32>
    %7 = vector.multi_reduction <add>, %2, %cst_6 [0] : vector<128x128xf32> to vector<128xf32>
    %8 = vector.shape_cast %7 : vector<128xf32> to vector<1x128xf32>
    %9 = arith.addf %6, %8 : vector<1x128xf32>
    %c0_7 = arith.constant 0 : index
    %c0_8 = arith.constant 0 : index
    %10 = vector.load %arg3[%c0_7, %c0_8] : memref<8x128xf32, #tpu.memory_space<vmem>>, vector<1x128xf32>
    tpu.vector_store %arg3[%c0_7, %c0_8], %9 {strides = array<i32>} : memref<8x128xf32, #tpu.memory_space<vmem>>, vector<1x128xf32>,
    %c1 = arith.constant 1 : index
    %c0_9 = arith.constant 0 : index
    %11 = vector.load %arg3[%c1, %c0_9] : memref<8x128xf32, #tpu.memory_space<vmem>>, vector<1x128xf32>
    %12 = arith.mulf %2, %2 : vector<128x128xf32>
    %cst_10 = arith.constant dense<0.000000e+00> : vector<128xf32>
    %13 = vector.multi_reduction <add>, %12, %cst_10 [0] : vector<128x128xf32> to vector<128xf32>
    %14 = vector.shape_cast %13 : vector<128xf32> to vector<1x128xf32>
    %15 = arith.addf %11, %14 : vector<1x128xf32>
    %c1_11 = arith.constant 1 : index
    %c0_12 = arith.constant 0 : index
    %16 = vector.load %arg3[%c1_11, %c0_12] : memref<8x128xf32, #tpu.memory_space<vmem>>, vector<1x128xf32>
    tpu.vector_store %arg3[%c1_11, %c0_12], %15 {strides = array<i32>} : memref<8x128xf32, #tpu.memory_space<vmem>>, vector<1x128xf32>,
    return
  }
  func.func @transform_0(%arg0: i32) -> (i32, i32) {
    %c0_i32 = arith.constant 0 : i32
    %c0_i32_0 = arith.constant 0 : i32
    return %arg0, %c0_i32 : i32, i32
  }
  func.func @transform_1(%arg0: i32) -> (i32, i32) {
    %c0_i32 = arith.constant 0 : i32
    %c0_i32_0 = arith.constant 0 : i32
    %c0_i32_1 = arith.constant 0 : i32
    return %c0_i32, %c0_i32_0 : i32, i32
  }
  func.func @transform_2(%arg0: i32) -> (i32, i32) {
    %c0_i32 = arith.constant 0 : i32
    %c0_i32_0 = arith.constant 0 : i32
    %c0_i32_1 = arith.constant 0 : i32
    return %c0_i32, %c0_i32_0 : i32, i32
  }
}

module attributes {stable_mosaic.version = 11 : i64} {
  func.func @_matmul_bn_act_kernel(%arg0: i32, %arg1: memref<128x128xbf16, #tpu.memory_space<vmem>>, %arg2: memref<128x128xbf16, #tpu.memory_space<vmem>>, %arg3: memref<8x128xf32, #tpu.memory_space<vmem>>, %arg4: memref<8x128xf32, #tpu.memory_space<vmem>>, %arg5: memref<128x128xbf16, #tpu.memory_space<vmem>>) attributes {dimension_semantics = [#tpu.dimension_semantics<parallel>], iteration_bounds = array<i64: 4>, scalar_prefetch = 0 : i64, scratch_operands = 0 : i64, tpu.core_type = #tpu.core_type<tc>, window_params = [{transform_indices = @transform_0, window_bounds = array<i64: 128, 128>}, {pipeline_mode = #tpu.pipeline_mode<synchronous>, transform_indices = @transform_1, window_bounds = array<i64: 128, 128>}, {pipeline_mode = #tpu.pipeline_mode<synchronous>, transform_indices = @transform_2, window_bounds = array<i64: 8, 128>}, {pipeline_mode = #tpu.pipeline_mode<synchronous>, transform_indices = @transform_3, window_bounds = array<i64: 8, 128>}, {transform_indices = @transform_4, window_bounds = array<i64: 128, 128>}]} {
    %c0 = arith.constant 0 : index
    %c0_0 = arith.constant 0 : index
    %0 = vector.load %arg1[%c0, %c0_0] : memref<128x128xbf16, #tpu.memory_space<vmem>>, vector<128x128xbf16>
    %c0_1 = arith.constant 0 : index
    %c0_2 = arith.constant 0 : index
    %1 = vector.load %arg2[%c0_1, %c0_2] : memref<128x128xbf16, #tpu.memory_space<vmem>>, vector<128x128xbf16>
    %cst = arith.constant dense<0.000000e+00> : vector<128x128xf32>
    %2 = tpu.matmul %0, %1, %cst {dimension_numbers = #tpu.dot_dimension_numbers<[1], [0], [0], [1], [0, 0, 1, 1], [], []>} : vector<128x128xbf16>, vector<128x128xbf16>, vector<128x128xf32> -> vector<128x128xf32>
    %c0_3 = arith.constant 0 : index
    %c0_4 = arith.constant 0 : index
    %3 = vector.load %arg3[%c0_3, %c0_4] : memref<8x128xf32, #tpu.memory_space<vmem>>, vector<1x128xf32>
    %cst_5 = arith.constant 0.001953125 : f32
    %4 = vector.broadcast %cst_5 : f32 to vector<1x128xf32>
    %5 = arith.mulf %3, %4 : vector<1x128xf32>
    %c1 = arith.constant 1 : index
    %c0_6 = arith.constant 0 : index
    %6 = vector.load %arg3[%c1, %c0_6] : memref<8x128xf32, #tpu.memory_space<vmem>>, vector<1x128xf32>
    %cst_7 = arith.constant 0.001953125 : f32
    %7 = vector.broadcast %cst_7 : f32 to vector<1x128xf32>
    %8 = arith.mulf %6, %7 : vector<1x128xf32>
    %9 = arith.mulf %5, %5 : vector<1x128xf32>
    %10 = arith.subf %8, %9 : vector<1x128xf32>
    %cst_8 = arith.constant 9.99999974E-6 : f32
    %11 = vector.broadcast %cst_8 : f32 to vector<1x128xf32>
    %12 = arith.addf %10, %11 : vector<1x128xf32>
    %13 = math.rsqrt %12 : vector<1x128xf32>
    %c0_9 = arith.constant 0 : index
    %c0_10 = arith.constant 0 : index
    %14 = vector.load %arg4[%c0_9, %c0_10] : memref<8x128xf32, #tpu.memory_space<vmem>>, vector<1x128xf32>
    %15 = arith.mulf %14, %13 : vector<1x128xf32>
    %c1_11 = arith.constant 1 : index
    %c0_12 = arith.constant 0 : index
    %16 = vector.load %arg4[%c1_11, %c0_12] : memref<8x128xf32, #tpu.memory_space<vmem>>, vector<1x128xf32>
    %17 = arith.mulf %5, %15 : vector<1x128xf32>
    %18 = arith.subf %16, %17 : vector<1x128xf32>
    %19 = vector.broadcast %15 : vector<1x128xf32> to vector<128x128xf32>
    %20 = arith.mulf %2, %19 : vector<128x128xf32>
    %21 = vector.broadcast %18 : vector<1x128xf32> to vector<128x128xf32>
    %22 = arith.addf %20, %21 : vector<128x128xf32>
    %cst_13 = arith.constant 0.000000e+00 : f32
    %23 = vector.broadcast %cst_13 : f32 to vector<128x128xf32>
    %24 = arith.maximumf %22, %23 : vector<128x128xf32>
    %25 = arith.truncf %24 : vector<128x128xf32> to vector<128x128xbf16>
    %c0_14 = arith.constant 0 : index
    %c0_15 = arith.constant 0 : index
    %26 = vector.load %arg5[%c0_14, %c0_15] : memref<128x128xbf16, #tpu.memory_space<vmem>>, vector<128x128xbf16>
    tpu.vector_store %arg5[%c0_14, %c0_15], %25 {strides = array<i32>} : memref<128x128xbf16, #tpu.memory_space<vmem>>, vector<128x128xbf16>,
    return
  }
  func.func @transform_0(%arg0: i32) -> (i32, i32) {
    %c0_i32 = arith.constant 0 : i32
    %c0_i32_0 = arith.constant 0 : i32
    return %arg0, %c0_i32 : i32, i32
  }
  func.func @transform_1(%arg0: i32) -> (i32, i32) {
    %c0_i32 = arith.constant 0 : i32
    %c0_i32_0 = arith.constant 0 : i32
    %c0_i32_1 = arith.constant 0 : i32
    return %c0_i32, %c0_i32_0 : i32, i32
  }
  func.func @transform_2(%arg0: i32) -> (i32, i32) {
    %c0_i32 = arith.constant 0 : i32
    %c0_i32_0 = arith.constant 0 : i32
    %c0_i32_1 = arith.constant 0 : i32
    return %c0_i32, %c0_i32_0 : i32, i32
  }
  func.func @transform_3(%arg0: i32) -> (i32, i32) {
    %c0_i32 = arith.constant 0 : i32
    %c0_i32_0 = arith.constant 0 : i32
    %c0_i32_1 = arith.constant 0 : i32
    return %c0_i32, %c0_i32_0 : i32, i32
  }
  func.func @transform_4(%arg0: i32) -> (i32, i32) {
    %c0_i32 = arith.constant 0 : i32
    %c0_i32_0 = arith.constant 0 : i32
    return %arg0, %c0_i32 : i32, i32
  }
}

module attributes {stable_mosaic.version = 11 : i64} {
  func.func @_matmul_bn_add_relu_kernel(%arg0: i32, %arg1: memref<128x128xbf16, #tpu.memory_space<vmem>>, %arg2: memref<128x128xbf16, #tpu.memory_space<vmem>>, %arg3: memref<8x128xf32, #tpu.memory_space<vmem>>, %arg4: memref<8x128xf32, #tpu.memory_space<vmem>>, %arg5: memref<128x128xf32, #tpu.memory_space<vmem>>, %arg6: memref<128x128xf32, #tpu.memory_space<vmem>>) attributes {dimension_semantics = [#tpu.dimension_semantics<parallel>], iteration_bounds = array<i64: 4>, scalar_prefetch = 0 : i64, scratch_operands = 0 : i64, tpu.core_type = #tpu.core_type<tc>, window_params = [{transform_indices = @transform_0, window_bounds = array<i64: 128, 128>}, {pipeline_mode = #tpu.pipeline_mode<synchronous>, transform_indices = @transform_1, window_bounds = array<i64: 128, 128>}, {pipeline_mode = #tpu.pipeline_mode<synchronous>, transform_indices = @transform_2, window_bounds = array<i64: 8, 128>}, {pipeline_mode = #tpu.pipeline_mode<synchronous>, transform_indices = @transform_3, window_bounds = array<i64: 8, 128>}, {transform_indices = @transform_4, window_bounds = array<i64: 128, 128>}, {transform_indices = @transform_5, window_bounds = array<i64: 128, 128>}]} {
    %c0 = arith.constant 0 : index
    %c0_0 = arith.constant 0 : index
    %0 = vector.load %arg1[%c0, %c0_0] : memref<128x128xbf16, #tpu.memory_space<vmem>>, vector<128x128xbf16>
    %c0_1 = arith.constant 0 : index
    %c0_2 = arith.constant 0 : index
    %1 = vector.load %arg2[%c0_1, %c0_2] : memref<128x128xbf16, #tpu.memory_space<vmem>>, vector<128x128xbf16>
    %cst = arith.constant dense<0.000000e+00> : vector<128x128xf32>
    %2 = tpu.matmul %0, %1, %cst {dimension_numbers = #tpu.dot_dimension_numbers<[1], [0], [0], [1], [0, 0, 1, 1], [], []>} : vector<128x128xbf16>, vector<128x128xbf16>, vector<128x128xf32> -> vector<128x128xf32>
    %c0_3 = arith.constant 0 : index
    %c0_4 = arith.constant 0 : index
    %3 = vector.load %arg3[%c0_3, %c0_4] : memref<8x128xf32, #tpu.memory_space<vmem>>, vector<1x128xf32>
    %cst_5 = arith.constant 0.001953125 : f32
    %4 = vector.broadcast %cst_5 : f32 to vector<1x128xf32>
    %5 = arith.mulf %3, %4 : vector<1x128xf32>
    %c1 = arith.constant 1 : index
    %c0_6 = arith.constant 0 : index
    %6 = vector.load %arg3[%c1, %c0_6] : memref<8x128xf32, #tpu.memory_space<vmem>>, vector<1x128xf32>
    %cst_7 = arith.constant 0.001953125 : f32
    %7 = vector.broadcast %cst_7 : f32 to vector<1x128xf32>
    %8 = arith.mulf %6, %7 : vector<1x128xf32>
    %9 = arith.mulf %5, %5 : vector<1x128xf32>
    %10 = arith.subf %8, %9 : vector<1x128xf32>
    %cst_8 = arith.constant 9.99999974E-6 : f32
    %11 = vector.broadcast %cst_8 : f32 to vector<1x128xf32>
    %12 = arith.addf %10, %11 : vector<1x128xf32>
    %13 = math.rsqrt %12 : vector<1x128xf32>
    %c0_9 = arith.constant 0 : index
    %c0_10 = arith.constant 0 : index
    %14 = vector.load %arg4[%c0_9, %c0_10] : memref<8x128xf32, #tpu.memory_space<vmem>>, vector<1x128xf32>
    %15 = arith.mulf %14, %13 : vector<1x128xf32>
    %c1_11 = arith.constant 1 : index
    %c0_12 = arith.constant 0 : index
    %16 = vector.load %arg4[%c1_11, %c0_12] : memref<8x128xf32, #tpu.memory_space<vmem>>, vector<1x128xf32>
    %17 = arith.mulf %5, %15 : vector<1x128xf32>
    %18 = arith.subf %16, %17 : vector<1x128xf32>
    %19 = vector.broadcast %15 : vector<1x128xf32> to vector<128x128xf32>
    %20 = arith.mulf %2, %19 : vector<128x128xf32>
    %21 = vector.broadcast %18 : vector<1x128xf32> to vector<128x128xf32>
    %22 = arith.addf %20, %21 : vector<128x128xf32>
    %c0_13 = arith.constant 0 : index
    %c0_14 = arith.constant 0 : index
    %23 = vector.load %arg5[%c0_13, %c0_14] : memref<128x128xf32, #tpu.memory_space<vmem>>, vector<128x128xf32>
    %24 = arith.addf %22, %23 : vector<128x128xf32>
    %cst_15 = arith.constant 0.000000e+00 : f32
    %25 = vector.broadcast %cst_15 : f32 to vector<128x128xf32>
    %26 = arith.maximumf %24, %25 : vector<128x128xf32>
    %c0_16 = arith.constant 0 : index
    %c0_17 = arith.constant 0 : index
    %27 = vector.load %arg6[%c0_16, %c0_17] : memref<128x128xf32, #tpu.memory_space<vmem>>, vector<128x128xf32>
    tpu.vector_store %arg6[%c0_16, %c0_17], %26 {strides = array<i32>} : memref<128x128xf32, #tpu.memory_space<vmem>>, vector<128x128xf32>,
    return
  }
  func.func @transform_0(%arg0: i32) -> (i32, i32) {
    %c0_i32 = arith.constant 0 : i32
    %c0_i32_0 = arith.constant 0 : i32
    return %arg0, %c0_i32 : i32, i32
  }
  func.func @transform_1(%arg0: i32) -> (i32, i32) {
    %c0_i32 = arith.constant 0 : i32
    %c0_i32_0 = arith.constant 0 : i32
    %c0_i32_1 = arith.constant 0 : i32
    return %c0_i32, %c0_i32_0 : i32, i32
  }
  func.func @transform_2(%arg0: i32) -> (i32, i32) {
    %c0_i32 = arith.constant 0 : i32
    %c0_i32_0 = arith.constant 0 : i32
    %c0_i32_1 = arith.constant 0 : i32
    return %c0_i32, %c0_i32_0 : i32, i32
  }
  func.func @transform_3(%arg0: i32) -> (i32, i32) {
    %c0_i32 = arith.constant 0 : i32
    %c0_i32_0 = arith.constant 0 : i32
    %c0_i32_1 = arith.constant 0 : i32
    return %c0_i32, %c0_i32_0 : i32, i32
  }
  func.func @transform_4(%arg0: i32) -> (i32, i32) {
    %c0_i32 = arith.constant 0 : i32
    %c0_i32_0 = arith.constant 0 : i32
    return %arg0, %c0_i32 : i32, i32
  }
  func.func @transform_5(%arg0: i32) -> (i32, i32) {
    %c0_i32 = arith.constant 0 : i32
    %c0_i32_0 = arith.constant 0 : i32
    return %arg0, %c0_i32 : i32, i32
  }
}

</mosaic_0001>

<llo_original>
// kernel: _lambda_.6
$region0: #{_lambda_.6}
  #allocation0 [shape = 'u32[]', space=smem, size = 0x4, offset = 0x4, fixed_abs, tag = 'smem constant byte address 0x4 - core index']
  #allocation1 [shape = 'u32[72,128]{1,0:T(1,128)}', space=vmem, size = 0x9000, scoped, tag = 'internal scratch']
  %s0 = inlined_call_operand.vmem [shape: bf16[512,128], index: 0, kind: input, shape index: {}]
  %s1 = inlined_call_operand.vmem [shape: bf16[128,128], index: 1, kind: input, shape index: {}]
  %s2 = inlined_call_operand.vmem [shape: f32[8,128], index: 2, kind: output, shape index: {}]
  %s3 = sld [smem:[#allocation0]]
  $region45: #{_lambda_.6} parent=0
    _
  %s5 = ssub.s32 1, %s3
  %s6 = scalar_select 0, %s5, %s3
  loop: start=0, step=1, limit=6
  $region2: #{_lambda_.6} parent=0 // loop_pre_header
    _
  $region3: #{_lambda_.6} parent=0 // loop_header
    %s8 = sphi 0, %s12
    %p9 = scmp.ge.s32.totalorder %s8, 6
    %s18 = sphi 0, %s20
    %s21 = sphi 0, %s18
    %s22 = sphi 0, %s21
    %s38 = sphi 0, %s22
    %s42 = sphi 0, %s42
    %s44 = sphi 0, %s42
    %s45 = sphi 0, %s44
    %s59 = sphi 0, %s45
    %s63 = sphi 0, %s63
    %s65 = sphi 0, %s63
    %s66 = sphi 0, %s65
    %s80 = sphi 0, %s66
  $region4: #{_lambda_.6} parent=0 // loop_header_branch
    %11 = sbr.rel (%p9) target = $region8
  $region5: #{_lambda_.6} parent=0 // loop_body
    %s13 = ssub.s32 %s8, 1
    %s14 = ssub.s32 %s8, 2
    %s15 = sadd.s32 %s8, 1
    %s16 = ssub.s32 %s8, %s15
    %p17 = scmp.eq.s32.totalorder %s16, 0
    %s19 = sadd.s32 %s18, 1
    %s20 = scalar_select %p17, %s18, %s19
    %p23 = pneg %p17
    %p24 = scmp.eq.s32.totalorder %s8, 3
    %p25 = por %p23, %p24
    %p26 = scmp.ne.s32.totalorder %s18, %s21
    %p27 = scmp.eq.s32.totalorder %s8, 0
    %p28 = por %p26, %p27
    %p29 = scmp.ne.s32.totalorder %s18, %s21
    %p30 = scmp.eq.s32.totalorder %s13, 3
    %p31 = por %p29, %p30
    %p32 = scmp.ne.s32.totalorder %s21, %s22
    %p33 = scmp.eq.s32.totalorder %s13, 0
    %p34 = por %p32, %p33
    %p35 = scmp.ne.s32.totalorder %s21, %s22
    %p36 = scmp.eq.s32.totalorder %s14, 3
    %p37 = por %p35, %p36
    %p39 = scmp.ne.s32.totalorder %s22, %s38
    %p40 = scmp.eq.s32.totalorder %s14, 0
    %p41 = por %p39, %p40
    %s43 = sadd.s32 %s42, 1
    %p46 = scmp.eq.s32.totalorder %s8, 3
    %p47 = scmp.ne.s32.totalorder %s42, %s44
    %p48 = scmp.eq.s32.totalorder %s8, 0
    %p49 = por %p47, %p48
    %p50 = scmp.ne.s32.totalorder %s42, %s44
    %p51 = scmp.eq.s32.totalorder %s13, 3
    %p52 = por %p50, %p51
    %p53 = scmp.ne.s32.totalorder %s44, %s45
    %p54 = scmp.eq.s32.totalorder %s13, 0
    %p55 = por %p53, %p54
    %p56 = scmp.ne.s32.totalorder %s44, %s45
    %p57 = scmp.eq.s32.totalorder %s14, 3
    %p58 = por %p56, %p57
    %p60 = scmp.ne.s32.totalorder %s45, %s59
    %p61 = scmp.eq.s32.totalorder %s14, 0
    %p62 = por %p60, %p61
    %s64 = sadd.s32 %s63, 1
    %p67 = scmp.eq.s32.totalorder %s8, 3
    %p68 = scmp.ne.s32.totalorder %s63, %s65
    %p69 = scmp.eq.s32.totalorder %s8, 0
    %p70 = por %p68, %p69
    %p71 = scmp.ne.s32.totalorder %s63, %s65
    %p72 = scmp.eq.s32.totalorder %s13, 3
    %p73 = por %p71, %p72
    %p74 = scmp.ne.s32.totalorder %s65, %s66
    %p75 = scmp.eq.s32.totalorder %s13, 0
    %p76 = por %p74, %p75
    %p77 = scmp.ne.s32.totalorder %s65, %s66
    %p78 = scmp.eq.s32.totalorder %s14, 3
    %p79 = por %p77, %p78
    %p81 = scmp.ne.s32.totalorder %s66, %s80
    %p82 = scmp.eq.s32.totalorder %s14, 0
    %p83 = por %p81, %p82
    %p84 = scmp.le.s32.totalorder 1, %s8
    %p85 = scmp.lt.s32.totalorder %s8, 5
    %p86 = pnand %p84, %p85
    %p87 = pneg %p86
    // Predicated region
    $region9: #{_lambda_.6} parent=5 // pred_check
      _
    $region10: #{_lambda_.6} parent=5 // pred_check_branch
      %89 = sbr.rel (%p86) target = $region12
    $region11: #{_lambda_.6} parent=5 // pred_region
      %s90 = ssub.s32 %s8, 1
      // Predicated region
      $region13: #{_lambda_.6} parent=11 // pred_check
        %p91 = pneg %p55
      $region14: #{_lambda_.6} parent=11 // pred_check_branch
        %93 = sbr.rel (%p91) target = $region16
      $region15: #{_lambda_.6} parent=11 // pred_region
        _
      $region16: #{_lambda_.6} parent=11 // pred_fallthru
        _
    $region12: #{_lambda_.6} parent=5 // pred_fallthru
      _
    %p94 = scmp.lt.s32.totalorder %s8, 4
    // Predicated region
    $region17: #{_lambda_.6} parent=5 // pred_check
      %p95 = pneg %p94
    $region18: #{_lambda_.6} parent=5 // pred_check_branch
      %97 = sbr.rel (%p95) target = $region20
    $region19: #{_lambda_.6} parent=5 // pred_region
      // Predicated region
      $region21: #{_lambda_.6} parent=19 // pred_check
        %p98 = pneg %p28
      $region22: #{_lambda_.6} parent=19 // pred_check_branch
        %100 = sbr.rel (%p98) target = $region24
      $region23: #{_lambda_.6} parent=19 // pred_region
        %s101 = smul.u32 16, %s8
        %p102 = scmp.lt.s32.totalorder %s101, 63
        %s103 = scalar_select %p102, %s101, 63
        %s104 = smul.addr %s103, 4
        %s105 = scalar_lea.vmem %s0, %s104
        %s106 = smul.u32 16, %s8
      $region24: #{_lambda_.6} parent=19 // pred_fallthru
        _
    $region20: #{_lambda_.6} parent=5 // pred_fallthru
      _
    %p107 = scmp.le.s32.totalorder 1, %s8
    %p108 = scmp.lt.s32.totalorder %s8, 5
    %p109 = pnand %p107, %p108
    %p110 = pneg %p109
    // Predicated region
    $region25: #{_lambda_.6} parent=5 // pred_check
      _
    $region26: #{_lambda_.6} parent=5 // pred_check_branch
      %112 = sbr.rel (%p109) target = $region28
    $region27: #{_lambda_.6} parent=5 // pred_region
      %s113 = ssub.s32 %s8, 1
      %s114 = smul.u32 16, %s13
      %p115 = scmp.lt.s32.totalorder %s114, 63
      %s116 = scalar_select %p115, %s114, 63
      %s117 = smul.addr %s116, 4
      %s118 = scalar_lea.vmem %s0, %s117
      %p119 = pneg %p34
      %p120 = pneg %p31
      %p121 = pneg %p55
      %p122 = pneg %p52
      %p123 = pneg %p76
      %p124 = pneg %p73
      %s125 = smul.u32 16, %s13
      %p126 = scmp.lt.s32.totalorder %s125, 63
      %s127 = scalar_select %p126, %s125, 63
      %s128 = smul.addr %s127, 4
      %s129 = scalar_lea.vmem %s0, %s128
      %s130 = smul.u32 16, %s13
      %v131 = vld [vmem:[%s129] sm:$0xf]
      %v132 = vld [vmem:[%s129 + $0x4] sm:$0xf]
      %v133 = vld [vmem:[%s129 + $0x8] sm:$0xf]
      %v134 = vld [vmem:[%s129 + $0xc] sm:$0xf]
      %v135 = vld [vmem:[%s129 + $0x10] sm:$0xf]
      %v136 = vld [vmem:[%s129 + $0x14] sm:$0xf]
      %v137 = vld [vmem:[%s129 + $0x18] sm:$0xf]
      %v138 = vld [vmem:[%s129 + $0x1c] sm:$0xf]
      %v139 = vld [vmem:[%s129 + $0x20] sm:$0xf]
      %v140 = vld [vmem:[%s129 + $0x24] sm:$0xf]
      %v141 = vld [vmem:[%s129 + $0x28] sm:$0xf]
      %v142 = vld [vmem:[%s129 + $0x2c] sm:$0xf]
      %v143 = vld [vmem:[%s129 + $0x30] sm:$0xf]
      %v144 = vld [vmem:[%s129 + $0x34] sm:$0xf]
      %v145 = vld [vmem:[%s129 + $0x38] sm:$0xf]
      %v146 = vld [vmem:[%s129 + $0x3c] sm:$0xf]
      %v147 = vld [vmem:[%s1] sm:$0xf]
      %v148 = vld [vmem:[%s1 + $0x4] sm:$0xf]
      %v149 = vld [vmem:[%s1 + $0x8] sm:$0xf]
      %v150 = vld [vmem:[%s1 + $0xc] sm:$0xf]
      %v151 = vld [vmem:[%s1 + $0x10] sm:$0xf]
      %v152 = vld [vmem:[%s1 + $0x14] sm:$0xf]
      %v153 = vld [vmem:[%s1 + $0x18] sm:$0xf]
      %v154 = vld [vmem:[%s1 + $0x1c] sm:$0xf]
      %v155 = vld [vmem:[%s1 + $0x20] sm:$0xf]
      %v156 = vld [vmem:[%s1 + $0x24] sm:$0xf]
      %v157 = vld [vmem:[%s1 + $0x28] sm:$0xf]
      %v158 = vld [vmem:[%s1 + $0x2c] sm:$0xf]
      %v159 = vld [vmem:[%s1 + $0x30] sm:$0xf]
      %v160 = vld [vmem:[%s1 + $0x34] sm:$0xf]
      %v161 = vld [vmem:[%s1 + $0x38] sm:$0xf]
      %v162 = vld [vmem:[%s1 + $0x3c] sm:$0xf]
      %v179 = vunpack.c.l.b16 %v131
      %v180 = vunpack.c.l.b16 %v132
      %v181 = vunpack.c.l.b16 %v133
      %v182 = vunpack.c.l.b16 %v134
      %v183 = vunpack.c.l.b16 %v135
      %v184 = vunpack.c.l.b16 %v136
      %v185 = vunpack.c.l.b16 %v137
      %v186 = vunpack.c.l.b16 %v138
      %v187 = vunpack.c.l.b16 %v139
      %v188 = vunpack.c.l.b16 %v140
      %v189 = vunpack.c.l.b16 %v141
      %v190 = vunpack.c.l.b16 %v142
      %v191 = vunpack.c.l.b16 %v143
      %v192 = vunpack.c.l.b16 %v144
      %v193 = vunpack.c.l.b16 %v145
      %v194 = vunpack.c.l.b16 %v146
      %v195 = vpack.c.b16 %v180, %v179
      %v196 = vpack.c.b16 %v182, %v181
      %v197 = vpack.c.b16 %v184, %v183
      %v198 = vpack.c.b16 %v186, %v185
      %v199 = vpack.c.b16 %v188, %v187
      %v200 = vpack.c.b16 %v190, %v189
      %v201 = vpack.c.b16 %v192, %v191
      %v202 = vpack.c.b16 %v194, %v193
      %v227 = vunpack.c.l.b16 %v147
      %v228 = vunpack.c.l.b16 %v148
      %v229 = vunpack.c.l.b16 %v149
      %v230 = vunpack.c.l.b16 %v150
      %v231 = vunpack.c.l.b16 %v151
      %v232 = vunpack.c.l.b16 %v152
      %v233 = vunpack.c.l.b16 %v153
      %v234 = vunpack.c.l.b16 %v154
      %v235 = vunpack.c.l.b16 %v155
      %v236 = vunpack.c.l.b16 %v156
      %v237 = vunpack.c.l.b16 %v157
      %v238 = vunpack.c.l.b16 %v158
      %v239 = vunpack.c.l.b16 %v159
      %v240 = vunpack.c.l.b16 %v160
      %v241 = vunpack.c.l.b16 %v161
      %v242 = vunpack.c.l.b16 %v162
      %v243 = vpack.c.b16 %v228, %v227
      %v244 = vpack.c.b16 %v230, %v229
      %v245 = vpack.c.b16 %v232, %v231
      %v246 = vpack.c.b16 %v234, %v233
      %v247 = vpack.c.b16 %v236, %v235
      %v248 = vpack.c.b16 %v238, %v237
      %v249 = vpack.c.b16 %v240, %v239
      %v250 = vpack.c.b16 %v242, %v241
      %259 = vmatpush.bf16.msra.mxu0 %v250
      %260 = vmatpush.bf16.msra.mxu0 %v249
      %261 = vmatpush.bf16.msra.mxu0 %v248
      %262 = vmatpush.bf16.msra.mxu0 %v247
      %263 = vmatpush.bf16.msra.mxu0 %v246
      %264 = vmatpush.bf16.msra.mxu0 %v245
      %265 = vmatpush.bf16.msra.mxu0 %v244
      %266 = vmatpush.bf16.msra.mxu0 %v243
      %267 = vmatmul.bf16.gmra.mxu0 %v195
      %v268 = vpop.f32.mrf.mxu0
      %v269 = vadd.f32 0.0, %v268
      %v270 = vpop.f32.mrf.mxu0
      %v271 = vadd.f32 0.0, %v270
      %272 = vmatmul.bf16.gmra.mxu0 %v196
      %v273 = vpop.f32.mrf.mxu0
      %v274 = vadd.f32 0.0, %v273
      %v275 = vpop.f32.mrf.mxu0
      %v276 = vadd.f32 0.0, %v275
      %277 = vmatmul.bf16.gmra.mxu0 %v197
      %v278 = vpop.f32.mrf.mxu0
      %v279 = vadd.f32 0.0, %v278
      %v280 = vpop.f32.mrf.mxu0
      %v281 = vadd.f32 0.0, %v280
      %282 = vmatmul.bf16.gmra.mxu0 %v198
      %v283 = vpop.f32.mrf.mxu0
      %v284 = vadd.f32 0.0, %v283
      %v285 = vpop.f32.mrf.mxu0
      %v286 = vadd.f32 0.0, %v285
      %287 = vmatmul.bf16.gmra.mxu0 %v199
      %v288 = vpop.f32.mrf.mxu0
      %v289 = vadd.f32 0.0, %v288
      %v290 = vpop.f32.mrf.mxu0
      %v291 = vadd.f32 0.0, %v290
      %292 = vmatmul.bf16.gmra.mxu0 %v200
      %v293 = vpop.f32.mrf.mxu0
      %v294 = vadd.f32 0.0, %v293
      %v295 = vpop.f32.mrf.mxu0
      %v296 = vadd.f32 0.0, %v295
      %297 = vmatmul.bf16.gmra.mxu0 %v201
      %v298 = vpop.f32.mrf.mxu0
      %v299 = vadd.f32 0.0, %v298
      %v300 = vpop.f32.mrf.mxu0
      %v301 = vadd.f32 0.0, %v300
      %302 = vmatmul.bf16.gmra.mxu0 %v202
      %v303 = vpop.f32.mrf.mxu0
      %v304 = vadd.f32 0.0, %v303
      %v305 = vpop.f32.mrf.mxu0
      %v306 = vadd.f32 0.0, %v305
      %307 = vdwg.mxu0
      %p308 = scmp.eq.s32.totalorder %s13, 0
      // Predicated region
      $region29: #{_lambda_.6} parent=27 // pred_check
        %p309 = pneg %p308
      $region30: #{_lambda_.6} parent=27 // pred_check_branch
        %311 = sbr.rel (%p309) target = $region32
      $region31: #{_lambda_.6} parent=27 // pred_region
        %312 = vst [vmem:[%s2] sm:$0xff] 0.0
      $region32: #{_lambda_.6} parent=27 // pred_fallthru
        _
      %v313 = vld [vmem:[%s2] sm:$0x1]
      %v314 = vadd.f32 %v269, %v271
      %v315 = vadd.f32 %v314, %v274
      %v316 = vadd.f32 %v315, %v276
      %v317 = vadd.f32 %v316, %v279
      %v318 = vadd.f32 %v317, %v281
      %v319 = vadd.f32 %v318, %v284
      %v320 = vadd.f32 %v319, %v286
      %v321 = vadd.f32 %v320, %v289
      %v322 = vadd.f32 %v321, %v291
      %v323 = vadd.f32 %v322, %v294
      %v324 = vadd.f32 %v323, %v296
      %v325 = vadd.f32 %v324, %v299
      %v326 = vadd.f32 %v325, %v301
      %v327 = vadd.f32 %v326, %v304
      %v328 = vadd.f32 %v327, %v306
      %v329 = vrot.slane %v328, 4
      %v330 = vadd.f32 %v328, %v329
      %v331 = vrot.slane %v330, 2
      %v332 = vadd.f32 %v330, %v331
      %v333 = vrot.slane %v332, 1
      %v334 = vadd.f32 %v332, %v333
      %v335 = vadd.f32 %v313, %v334
      %336 = vst [vmem:[%s2] sm:$0x1] %v335
      %v337 = vld [vmem:[%s2 + $0x1] sm:$0x1]
      %v338 = vmul.f32 %v269, %v269
      %v339 = vmul.f32 %v271, %v271
      %v340 = vmul.f32 %v274, %v274
      %v341 = vmul.f32 %v276, %v276
      %v342 = vmul.f32 %v279, %v279
      %v343 = vmul.f32 %v281, %v281
      %v344 = vmul.f32 %v284, %v284
      %v345 = vmul.f32 %v286, %v286
      %v346 = vmul.f32 %v289, %v289
      %v347 = vmul.f32 %v291, %v291
      %v348 = vmul.f32 %v294, %v294
      %v349 = vmul.f32 %v296, %v296
      %v350 = vmul.f32 %v299, %v299
      %v351 = vmul.f32 %v301, %v301
      %v352 = vmul.f32 %v304, %v304
      %v353 = vmul.f32 %v306, %v306
      %v354 = vadd.f32 %v338, %v339
      %v355 = vadd.f32 %v354, %v340
      %v356 = vadd.f32 %v355, %v341
      %v357 = vadd.f32 %v356, %v342
      %v358 = vadd.f32 %v357, %v343
      %v359 = vadd.f32 %v358, %v344
      %v360 = vadd.f32 %v359, %v345
      %v361 = vadd.f32 %v360, %v346
      %v362 = vadd.f32 %v361, %v347
      %v363 = vadd.f32 %v362, %v348
      %v364 = vadd.f32 %v363, %v349
      %v365 = vadd.f32 %v364, %v350
      %v366 = vadd.f32 %v365, %v351
      %v367 = vadd.f32 %v366, %v352
      %v368 = vadd.f32 %v367, %v353
      %v369 = vrot.slane %v368, 4
      %v370 = vadd.f32 %v368, %v369
      %v371 = vrot.slane %v370, 2
      %v372 = vadd.f32 %v370, %v371
      %v373 = vrot.slane %v372, 1
      %v374 = vadd.f32 %v372, %v373
      %v375 = vadd.f32 %v337, %v374
      %376 = vst [vmem:[%s2 + $0x1] sm:$0x1] %v375
      // Predicated region
      $region33: #{_lambda_.6} parent=27 // pred_check
        %p377 = pneg %p73
      $region34: #{_lambda_.6} parent=27 // pred_check_branch
        %379 = sbr.rel (%p377) target = $region36
      $region35: #{_lambda_.6} parent=27 // pred_region
        _
      $region36: #{_lambda_.6} parent=27 // pred_fallthru
        _
      // Predicated region
      $region37: #{_lambda_.6} parent=27 // pred_check
        %p380 = pneg %p73
      $region38: #{_lambda_.6} parent=27 // pred_check_branch
        %382 = sbr.rel (%p380) target = $region40
      $region39: #{_lambda_.6} parent=27 // pred_region
        _
      $region40: #{_lambda_.6} parent=27 // pred_fallthru
        _
    $region28: #{_lambda_.6} parent=5 // pred_fallthru
      _
    %p383 = scmp.le.s32.totalorder 2, %s8
    // Predicated region
    $region41: #{_lambda_.6} parent=5 // pred_check
      %p384 = pneg %p383
    $region42: #{_lambda_.6} parent=5 // pred_check_branch
      %386 = sbr.rel (%p384) target = $region44
    $region43: #{_lambda_.6} parent=5 // pred_region
      %s387 = ssub.s32 %s8, 2
    $region44: #{_lambda_.6} parent=5 // pred_fallthru
      _
  $region6: #{_lambda_.6} parent=0 // loop_footer
    %s12 = sadd.s32 1, %s8
  $region7: #{_lambda_.6} parent=0 // loop_footer_branch
    %7 = sbr.rel target = $region3
  $region8: #{_lambda_.6} parent=0 // loop_exit
    _

// kernel: _lambda_.7
$region0: #{_lambda_.7}
  #allocation0 [shape = 'u32[]', space=smem, size = 0x4, offset = 0x4, fixed_abs, tag = 'smem constant byte address 0x4 - core index']
  #allocation1 [shape = 'u32[72,128]{1,0:T(1,128)}', space=vmem, size = 0x9000, scoped, tag = 'internal scratch']
  %s0 = inlined_call_operand.vmem [shape: bf16[512,128], index: 0, kind: input, shape index: {}]
  %s1 = inlined_call_operand.vmem [shape: bf16[128,128], index: 1, kind: input, shape index: {}]
  %s2 = inlined_call_operand.vmem [shape: f32[8,128], index: 2, kind: input, shape index: {}]
  %s3 = inlined_call_operand.vmem [shape: f32[8,128], index: 3, kind: input, shape index: {}]
  %s4 = inlined_call_operand.vmem [shape: bf16[512,128], index: 4, kind: output, shape index: {}]
  %s5 = sld [smem:[#allocation0]]
  $region49: #{_lambda_.7} parent=0
    _
  %s7 = ssub.s32 1, %s5
  %s8 = scalar_select 0, %s7, %s5
  loop: start=0, step=1, limit=6
  $region2: #{_lambda_.7} parent=0 // loop_pre_header
    _
  $region3: #{_lambda_.7} parent=0 // loop_header
    %s10 = sphi 0, %s14
    %p11 = scmp.ge.s32.totalorder %s10, 6
    %s20 = sphi 0, %s22
    %s23 = sphi 0, %s20
    %s24 = sphi 0, %s23
    %s40 = sphi 0, %s24
    %s44 = sphi 0, %s44
    %s46 = sphi 0, %s44
    %s47 = sphi 0, %s46
    %s61 = sphi 0, %s47
    %s65 = sphi 0, %s65
    %s67 = sphi 0, %s65
    %s68 = sphi 0, %s67
    %s82 = sphi 0, %s68
    %s86 = sphi 0, %s86
    %s88 = sphi 0, %s86
    %s89 = sphi 0, %s88
    %s103 = sphi 0, %s89
    %s109 = sphi 0, %s111
    %s112 = sphi 0, %s109
    %s113 = sphi 0, %s112
    %s129 = sphi 0, %s113
  $region4: #{_lambda_.7} parent=0 // loop_header_branch
    %13 = sbr.rel (%p11) target = $region8
  $region5: #{_lambda_.7} parent=0 // loop_body
    %s15 = ssub.s32 %s10, 1
    %s16 = ssub.s32 %s10, 2
    %s17 = sadd.s32 %s10, 1
    %s18 = ssub.s32 %s10, %s17
    %p19 = scmp.eq.s32.totalorder %s18, 0
    %s21 = sadd.s32 %s20, 1
    %s22 = scalar_select %p19, %s20, %s21
    %p25 = pneg %p19
    %p26 = scmp.eq.s32.totalorder %s10, 3
    %p27 = por %p25, %p26
    %p28 = scmp.ne.s32.totalorder %s20, %s23
    %p29 = scmp.eq.s32.totalorder %s10, 0
    %p30 = por %p28, %p29
    %p31 = scmp.ne.s32.totalorder %s20, %s23
    %p32 = scmp.eq.s32.totalorder %s15, 3
    %p33 = por %p31, %p32
    %p34 = scmp.ne.s32.totalorder %s23, %s24
    %p35 = scmp.eq.s32.totalorder %s15, 0
    %p36 = por %p34, %p35
    %p37 = scmp.ne.s32.totalorder %s23, %s24
    %p38 = scmp.eq.s32.totalorder %s16, 3
    %p39 = por %p37, %p38
    %p41 = scmp.ne.s32.totalorder %s24, %s40
    %p42 = scmp.eq.s32.totalorder %s16, 0
    %p43 = por %p41, %p42
    %s45 = sadd.s32 %s44, 1
    %p48 = scmp.eq.s32.totalorder %s10, 3
    %p49 = scmp.ne.s32.totalorder %s44, %s46
    %p50 = scmp.eq.s32.totalorder %s10, 0
    %p51 = por %p49, %p50
    %p52 = scmp.ne.s32.totalorder %s44, %s46
    %p53 = scmp.eq.s32.totalorder %s15, 3
    %p54 = por %p52, %p53
    %p55 = scmp.ne.s32.totalorder %s46, %s47
    %p56 = scmp.eq.s32.totalorder %s15, 0
    %p57 = por %p55, %p56
    %p58 = scmp.ne.s32.totalorder %s46, %s47
    %p59 = scmp.eq.s32.totalorder %s16, 3
    %p60 = por %p58, %p59
    %p62 = scmp.ne.s32.totalorder %s47, %s61
    %p63 = scmp.eq.s32.totalorder %s16, 0
    %p64 = por %p62, %p63
    %s66 = sadd.s32 %s65, 1
    %p69 = scmp.eq.s32.totalorder %s10, 3
    %p70 = scmp.ne.s32.totalorder %s65, %s67
    %p71 = scmp.eq.s32.totalorder %s10, 0
    %p72 = por %p70, %p71
    %p73 = scmp.ne.s32.totalorder %s65, %s67
    %p74 = scmp.eq.s32.totalorder %s15, 3
    %p75 = por %p73, %p74
    %p76 = scmp.ne.s32.totalorder %s67, %s68
    %p77 = scmp.eq.s32.totalorder %s15, 0
    %p78 = por %p76, %p77
    %p79 = scmp.ne.s32.totalorder %s67, %s68
    %p80 = scmp.eq.s32.totalorder %s16, 3
    %p81 = por %p79, %p80
    %p83 = scmp.ne.s32.totalorder %s68, %s82
    %p84 = scmp.eq.s32.totalorder %s16, 0
    %p85 = por %p83, %p84
    %s87 = sadd.s32 %s86, 1
    %p90 = scmp.eq.s32.totalorder %s10, 3
    %p91 = scmp.ne.s32.totalorder %s86, %s88
    %p92 = scmp.eq.s32.totalorder %s10, 0
    %p93 = por %p91, %p92
    %p94 = scmp.ne.s32.totalorder %s86, %s88
    %p95 = scmp.eq.s32.totalorder %s15, 3
    %p96 = por %p94, %p95
    %p97 = scmp.ne.s32.totalorder %s88, %s89
    %p98 = scmp.eq.s32.totalorder %s15, 0
    %p99 = por %p97, %p98
    %p100 = scmp.ne.s32.totalorder %s88, %s89
    %p101 = scmp.eq.s32.totalorder %s16, 3
    %p102 = por %p100, %p101
    %p104 = scmp.ne.s32.totalorder %s89, %s103
    %p105 = scmp.eq.s32.totalorder %s16, 0
    %p106 = por %p104, %p105
    %s107 = ssub.s32 %s10, %s17
    %p108 = scmp.eq.s32.totalorder %s107, 0
    %s110 = sadd.s32 %s109, 1
    %s111 = scalar_select %p108, %s109, %s110
    %p114 = pneg %p108
    %p115 = scmp.eq.s32.totalorder %s10, 3
    %p116 = por %p114, %p115
    %p117 = scmp.ne.s32.totalorder %s109, %s112
    %p118 = scmp.eq.s32.totalorder %s10, 0
    %p119 = por %p117, %p118
    %p120 = scmp.ne.s32.totalorder %s109, %s112
    %p121 = scmp.eq.s32.totalorder %s15, 3
    %p122 = por %p120, %p121
    %p123 = scmp.ne.s32.totalorder %s112, %s113
    %p124 = scmp.eq.s32.totalorder %s15, 0
    %p125 = por %p123, %p124
    %p126 = scmp.ne.s32.totalorder %s112, %s113
    %p127 = scmp.eq.s32.totalorder %s16, 3
    %p128 = por %p126, %p127
    %p130 = scmp.ne.s32.totalorder %s113, %s129
    %p131 = scmp.eq.s32.totalorder %s16, 0
    %p132 = por %p130, %p131
    %p133 = scmp.le.s32.totalorder 1, %s10
    %p134 = scmp.lt.s32.totalorder %s10, 5
    %p135 = pnand %p133, %p134
    %p136 = pneg %p135
    // Predicated region
    $region9: #{_lambda_.7} parent=5 // pred_check
      _
    $region10: #{_lambda_.7} parent=5 // pred_check_branch
      %138 = sbr.rel (%p135) target = $region12
    $region11: #{_lambda_.7} parent=5 // pred_region
      %s139 = ssub.s32 %s10, 1
      // Predicated region
      $region13: #{_lambda_.7} parent=11 // pred_check
        %p140 = pneg %p57
      $region14: #{_lambda_.7} parent=11 // pred_check_branch
        %142 = sbr.rel (%p140) target = $region16
      $region15: #{_lambda_.7} parent=11 // pred_region
        _
      $region16: #{_lambda_.7} parent=11 // pred_fallthru
        _
      // Predicated region
      $region17: #{_lambda_.7} parent=11 // pred_check
        %p143 = pneg %p78
      $region18: #{_lambda_.7} parent=11 // pred_check_branch
        %145 = sbr.rel (%p143) target = $region20
      $region19: #{_lambda_.7} parent=11 // pred_region
        _
      $region20: #{_lambda_.7} parent=11 // pred_fallthru
        _
      // Predicated region
      $region21: #{_lambda_.7} parent=11 // pred_check
        %p146 = pneg %p99
      $region22: #{_lambda_.7} parent=11 // pred_check_branch
        %148 = sbr.rel (%p146) target = $region24
      $region23: #{_lambda_.7} parent=11 // pred_region
        _
      $region24: #{_lambda_.7} parent=11 // pred_fallthru
        _
    $region12: #{_lambda_.7} parent=5 // pred_fallthru
      _
    %p149 = scmp.lt.s32.totalorder %s10, 4
    // Predicated region
    $region25: #{_lambda_.7} parent=5 // pred_check
      %p150 = pneg %p149
    $region26: #{_lambda_.7} parent=5 // pred_check_branch
      %152 = sbr.rel (%p150) target = $region28
    $region27: #{_lambda_.7} parent=5 // pred_region
      // Predicated region
      $region29: #{_lambda_.7} parent=27 // pred_check
        %p153 = pneg %p30
      $region30: #{_lambda_.7} parent=27 // pred_check_branch
        %155 = sbr.rel (%p153) target = $region32
      $region31: #{_lambda_.7} parent=27 // pred_region
        %s156 = smul.u32 16, %s10
        %p157 = scmp.lt.s32.totalorder %s156, 63
        %s158 = scalar_select %p157, %s156, 63
        %s159 = smul.addr %s158, 4
        %s160 = scalar_lea.vmem %s0, %s159
        %s161 = smul.u32 16, %s10
      $region32: #{_lambda_.7} parent=27 // pred_fallthru
        _
    $region28: #{_lambda_.7} parent=5 // pred_fallthru
      _
    %p162 = scmp.le.s32.totalorder 1, %s10
    %p163 = scmp.lt.s32.totalorder %s10, 5
    %p164 = pnand %p162, %p163
    %p165 = pneg %p164
    // Predicated region
    $region33: #{_lambda_.7} parent=5 // pred_check
      _
    $region34: #{_lambda_.7} parent=5 // pred_check_branch
      %167 = sbr.rel (%p164) target = $region36
    $region35: #{_lambda_.7} parent=5 // pred_region
      %s168 = ssub.s32 %s10, 1
      %s169 = smul.u32 16, %s15
      %p170 = scmp.lt.s32.totalorder %s169, 63
      %s171 = scalar_select %p170, %s169, 63
      %s172 = smul.addr %s171, 4
      %s173 = scalar_lea.vmem %s0, %s172
      %p174 = pneg %p36
      %p175 = pneg %p33
      %p176 = pneg %p57
      %p177 = pneg %p54
      %p178 = pneg %p78
      %p179 = pneg %p75
      %p180 = pneg %p99
      %p181 = pneg %p96
      %p182 = pneg %p125
      %p183 = pneg %p122
      %s184 = smul.u32 16, %s15
      %p185 = scmp.lt.s32.totalorder %s184, 63
      %s186 = scalar_select %p185, %s184, 63
      %s187 = smul.addr %s186, 4
      %s188 = scalar_lea.vmem %s4, %s187
      %s189 = smul.u32 16, %s15
      %p190 = scmp.lt.s32.totalorder %s189, 63
      %s191 = scalar_select %p190, %s189, 63
      %s192 = smul.addr %s191, 4
      %s193 = scalar_lea.vmem %s0, %s192
      %s194 = smul.u32 16, %s15
      %s195 = smul.u32 16, %s15
      %p196 = scmp.lt.s32.totalorder %s195, 63
      %s197 = scalar_select %p196, %s195, 63
      %s198 = smul.addr %s197, 4
      %s199 = scalar_lea.vmem %s4, %s198
      %s200 = smul.u32 16, %s15
      %v201 = vld [vmem:[%s193] sm:$0xf]
      %v202 = vld [vmem:[%s193 + $0x4] sm:$0xf]
      %v203 = vld [vmem:[%s193 + $0x8] sm:$0xf]
      %v204 = vld [vmem:[%s193 + $0xc] sm:$0xf]
      %v205 = vld [vmem:[%s193 + $0x10] sm:$0xf]
      %v206 = vld [vmem:[%s193 + $0x14] sm:$0xf]
      %v207 = vld [vmem:[%s193 + $0x18] sm:$0xf]
      %v208 = vld [vmem:[%s193 + $0x1c] sm:$0xf]
      %v209 = vld [vmem:[%s193 + $0x20] sm:$0xf]
      %v210 = vld [vmem:[%s193 + $0x24] sm:$0xf]
      %v211 = vld [vmem:[%s193 + $0x28] sm:$0xf]
      %v212 = vld [vmem:[%s193 + $0x2c] sm:$0xf]
      %v213 = vld [vmem:[%s193 + $0x30] sm:$0xf]
      %v214 = vld [vmem:[%s193 + $0x34] sm:$0xf]
      %v215 = vld [vmem:[%s193 + $0x38] sm:$0xf]
      %v216 = vld [vmem:[%s193 + $0x3c] sm:$0xf]
      %v217 = vld [vmem:[%s1] sm:$0xf]
      %v218 = vld [vmem:[%s1 + $0x4] sm:$0xf]
      %v219 = vld [vmem:[%s1 + $0x8] sm:$0xf]
      %v220 = vld [vmem:[%s1 + $0xc] sm:$0xf]
      %v221 = vld [vmem:[%s1 + $0x10] sm:$0xf]
      %v222 = vld [vmem:[%s1 + $0x14] sm:$0xf]
      %v223 = vld [vmem:[%s1 + $0x18] sm:$0xf]
      %v224 = vld [vmem:[%s1 + $0x1c] sm:$0xf]
      %v225 = vld [vmem:[%s1 + $0x20] sm:$0xf]
      %v226 = vld [vmem:[%s1 + $0x24] sm:$0xf]
      %v227 = vld [vmem:[%s1 + $0x28] sm:$0xf]
      %v228 = vld [vmem:[%s1 + $0x2c] sm:$0xf]
      %v229 = vld [vmem:[%s1 + $0x30] sm:$0xf]
      %v230 = vld [vmem:[%s1 + $0x34] sm:$0xf]
      %v231 = vld [vmem:[%s1 + $0x38] sm:$0xf]
      %v232 = vld [vmem:[%s1 + $0x3c] sm:$0xf]
      %v249 = vunpack.c.l.b16 %v201
      %v250 = vunpack.c.l.b16 %v202
      %v251 = vunpack.c.l.b16 %v203
      %v252 = vunpack.c.l.b16 %v204
      %v253 = vunpack.c.l.b16 %v205
      %v254 = vunpack.c.l.b16 %v206
      %v255 = vunpack.c.l.b16 %v207
      %v256 = vunpack.c.l.b16 %v208
      %v257 = vunpack.c.l.b16 %v209
      %v258 = vunpack.c.l.b16 %v210
      %v259 = vunpack.c.l.b16 %v211
      %v260 = vunpack.c.l.b16 %v212
      %v261 = vunpack.c.l.b16 %v213
      %v262 = vunpack.c.l.b16 %v214
      %v263 = vunpack.c.l.b16 %v215
      %v264 = vunpack.c.l.b16 %v216
      %v265 = vpack.c.b16 %v250, %v249
      %v266 = vpack.c.b16 %v252, %v251
      %v267 = vpack.c.b16 %v254, %v253
      %v268 = vpack.c.b16 %v256, %v255
      %v269 = vpack.c.b16 %v258, %v257
      %v270 = vpack.c.b16 %v260, %v259
      %v271 = vpack.c.b16 %v262, %v261
      %v272 = vpack.c.b16 %v264, %v263
      %v297 = vunpack.c.l.b16 %v217
      %v298 = vunpack.c.l.b16 %v218
      %v299 = vunpack.c.l.b16 %v219
      %v300 = vunpack.c.l.b16 %v220
      %v301 = vunpack.c.l.b16 %v221
      %v302 = vunpack.c.l.b16 %v222
      %v303 = vunpack.c.l.b16 %v223
      %v304 = vunpack.c.l.b16 %v224
      %v305 = vunpack.c.l.b16 %v225
      %v306 = vunpack.c.l.b16 %v226
      %v307 = vunpack.c.l.b16 %v227
      %v308 = vunpack.c.l.b16 %v228
      %v309 = vunpack.c.l.b16 %v229
      %v310 = vunpack.c.l.b16 %v230
      %v311 = vunpack.c.l.b16 %v231
      %v312 = vunpack.c.l.b16 %v232
      %v313 = vpack.c.b16 %v298, %v297
      %v314 = vpack.c.b16 %v300, %v299
      %v315 = vpack.c.b16 %v302, %v301
      %v316 = vpack.c.b16 %v304, %v303
      %v317 = vpack.c.b16 %v306, %v305
      %v318 = vpack.c.b16 %v308, %v307
      %v319 = vpack.c.b16 %v310, %v309
      %v320 = vpack.c.b16 %v312, %v311
      %329 = vmatpush.bf16.msra.mxu0 %v320
      %330 = vmatpush.bf16.msra.mxu0 %v319
      %331 = vmatpush.bf16.msra.mxu0 %v318
      %332 = vmatpush.bf16.msra.mxu0 %v317
      %333 = vmatpush.bf16.msra.mxu0 %v316
      %334 = vmatpush.bf16.msra.mxu0 %v315
      %335 = vmatpush.bf16.msra.mxu0 %v314
      %336 = vmatpush.bf16.msra.mxu0 %v313
      %337 = vmatmul.bf16.gmra.mxu0 %v265
      %v338 = vpop.f32.mrf.mxu0
      %v339 = vadd.f32 0.0, %v338
      %v340 = vpop.f32.mrf.mxu0
      %v341 = vadd.f32 0.0, %v340
      %342 = vmatmul.bf16.gmra.mxu0 %v266
      %v343 = vpop.f32.mrf.mxu0
      %v344 = vadd.f32 0.0, %v343
      %v345 = vpop.f32.mrf.mxu0
      %v346 = vadd.f32 0.0, %v345
      %347 = vmatmul.bf16.gmra.mxu0 %v267
      %v348 = vpop.f32.mrf.mxu0
      %v349 = vadd.f32 0.0, %v348
      %v350 = vpop.f32.mrf.mxu0
      %v351 = vadd.f32 0.0, %v350
      %352 = vmatmul.bf16.gmra.mxu0 %v268
      %v353 = vpop.f32.mrf.mxu0
      %v354 = vadd.f32 0.0, %v353
      %v355 = vpop.f32.mrf.mxu0
      %v356 = vadd.f32 0.0, %v355
      %357 = vmatmul.bf16.gmra.mxu0 %v269
      %v358 = vpop.f32.mrf.mxu0
      %v359 = vadd.f32 0.0, %v358
      %v360 = vpop.f32.mrf.mxu0
      %v361 = vadd.f32 0.0, %v360
      %362 = vmatmul.bf16.gmra.mxu0 %v270
      %v363 = vpop.f32.mrf.mxu0
      %v364 = vadd.f32 0.0, %v363
      %v365 = vpop.f32.mrf.mxu0
      %v366 = vadd.f32 0.0, %v365
      %367 = vmatmul.bf16.gmra.mxu0 %v271
      %v368 = vpop.f32.mrf.mxu0
      %v369 = vadd.f32 0.0, %v368
      %v370 = vpop.f32.mrf.mxu0
      %v371 = vadd.f32 0.0, %v370
      %372 = vmatmul.bf16.gmra.mxu0 %v272
      %v373 = vpop.f32.mrf.mxu0
      %v374 = vadd.f32 0.0, %v373
      %v375 = vpop.f32.mrf.mxu0
      %v376 = vadd.f32 0.0, %v375
      %377 = vdwg.mxu0
      %v378 = vld [vmem:[%s2] sm:$0x1]
      %v379 = vmul.f32 %v378, 0.001953125
      %v380 = vld [vmem:[%s2 + $0x1] sm:$0x1]
      %v381 = vmul.f32 %v380, 0.001953125
      %v382 = vmul.f32 %v379, %v379
      %v383 = vsub.f32 %v381, %v382
      %v384 = vadd.f32 %v383, 1e-05
      %v385 = vrsqrt.pop %v384
      %v386 = vmul.f32 %v385, %v384
      %v387 = vmul.f32 %v386, %v385
      %v388 = vmul.f32 0.5, %v387
      %v389 = vsub.f32 1.5, %v388
      %v390 = vmul.f32 %v385, %v389
      %vm391 = vweird.f32 %v384
      %vm392 = vweird.f32 %v385
      %vm393 = vmor %vm391, %vm392
      %v394 = vsel %vm393, %v385, %v390
      %v395 = vld [vmem:[%s3] sm:$0x1]
      %v396 = vmul.f32 %v395, %v394
      %v397 = vld [vmem:[%s3 + $0x1] sm:$0x1]
      %v398 = vmul.f32 %v379, %v396
      %v399 = vsub.f32 %v397, %v398
      %v400 = vperm.slane %v396, 0
      %v401 = vmul.f32 %v339, %v400
      %v402 = vmul.f32 %v341, %v400
      %v403 = vmul.f32 %v344, %v400
      %v404 = vmul.f32 %v346, %v400
      %v405 = vmul.f32 %v349, %v400
      %v406 = vmul.f32 %v351, %v400
      %v407 = vmul.f32 %v354, %v400
      %v408 = vmul.f32 %v356, %v400
      %v409 = vmul.f32 %v359, %v400
      %v410 = vmul.f32 %v361, %v400
      %v411 = vmul.f32 %v364, %v400
      %v412 = vmul.f32 %v366, %v400
      %v413 = vmul.f32 %v369, %v400
      %v414 = vmul.f32 %v371, %v400
      %v415 = vmul.f32 %v374, %v400
      %v416 = vmul.f32 %v376, %v400
      %v417 = vperm.slane %v399, 0
      %v418 = vadd.f32 %v401, %v417
      %v419 = vadd.f32 %v402, %v417
      %v420 = vadd.f32 %v403, %v417
      %v421 = vadd.f32 %v404, %v417
      %v422 = vadd.f32 %v405, %v417
      %v423 = vadd.f32 %v406, %v417
      %v424 = vadd.f32 %v407, %v417
      %v425 = vadd.f32 %v408, %v417
      %v426 = vadd.f32 %v409, %v417
      %v427 = vadd.f32 %v410, %v417
      %v428 = vadd.f32 %v411, %v417
      %v429 = vadd.f32 %v412, %v417
      %v430 = vadd.f32 %v413, %v417
      %v431 = vadd.f32 %v414, %v417
      %v432 = vadd.f32 %v415, %v417
      %v433 = vadd.f32 %v416, %v417
      %v434 = vmax.f32 %v418, 0.0
      %v435 = vmax.f32 %v419, 0.0
      %v436 = vmax.f32 %v420, 0.0
      %v437 = vmax.f32 %v421, 0.0
      %v438 = vmax.f32 %v422, 0.0
      %v439 = vmax.f32 %v423, 0.0
      %v440 = vmax.f32 %v424, 0.0
      %v441 = vmax.f32 %v425, 0.0
      %v442 = vmax.f32 %v426, 0.0
      %v443 = vmax.f32 %v427, 0.0
      %v444 = vmax.f32 %v428, 0.0
      %v445 = vmax.f32 %v429, 0.0
      %v446 = vmax.f32 %v430, 0.0
      %v447 = vmax.f32 %v431, 0.0
      %v448 = vmax.f32 %v432, 0.0
      %v449 = vmax.f32 %v433, 0.0
      %v450 = vpack.c.bf16 %v434, %v434
      %v451 = vpack.c.bf16 %v435, %v435
      %v452 = vpack.c.bf16 %v436, %v436
      %v453 = vpack.c.bf16 %v437, %v437
      %v454 = vpack.c.bf16 %v438, %v438
      %v455 = vpack.c.bf16 %v439, %v439
      %v456 = vpack.c.bf16 %v440, %v440
      %v457 = vpack.c.bf16 %v441, %v441
      %v458 = vpack.c.bf16 %v442, %v442
      %v459 = vpack.c.bf16 %v443, %v443
      %v460 = vpack.c.bf16 %v444, %v444
      %v461 = vpack.c.bf16 %v445, %v445
      %v462 = vpack.c.bf16 %v446, %v446
      %v463 = vpack.c.bf16 %v447, %v447
      %v464 = vpack.c.bf16 %v448, %v448
      %v465 = vpack.c.bf16 %v449, %v449
      %466 = vst [vmem:[%s199] sm:$0xf] %v450
      %467 = vst [vmem:[%s199 + $0x4] sm:$0xf] %v451
      %468 = vst [vmem:[%s199 + $0x8] sm:$0xf] %v452
      %469 = vst [vmem:[%s199 + $0xc] sm:$0xf] %v453
      %470 = vst [vmem:[%s199 + $0x10] sm:$0xf] %v454
      %471 = vst [vmem:[%s199 + $0x14] sm:$0xf] %v455
      %472 = vst [vmem:[%s199 + $0x18] sm:$0xf] %v456
      %473 = vst [vmem:[%s199 + $0x1c] sm:$0xf] %v457
      %474 = vst [vmem:[%s199 + $0x20] sm:$0xf] %v458
      %475 = vst [vmem:[%s199 + $0x24] sm:$0xf] %v459
      %476 = vst [vmem:[%s199 + $0x28] sm:$0xf] %v460
      %477 = vst [vmem:[%s199 + $0x2c] sm:$0xf] %v461
      %478 = vst [vmem:[%s199 + $0x30] sm:$0xf] %v462
      %479 = vst [vmem:[%s199 + $0x34] sm:$0xf] %v463
      %480 = vst [vmem:[%s199 + $0x38] sm:$0xf] %v464
      %481 = vst [vmem:[%s199 + $0x3c] sm:$0xf] %v465
      %s482 = smul.u32 16, %s15
      %p483 = scmp.lt.s32.totalorder %s482, 63
      %s484 = scalar_select %p483, %s482, 63
      %s485 = smul.addr %s484, 4
      %s486 = scalar_lea.vmem %s4, %s485
      // Predicated region
      $region37: #{_lambda_.7} parent=35 // pred_check
        %p487 = pneg %p122
      $region38: #{_lambda_.7} parent=35 // pred_check_branch
        %489 = sbr.rel (%p487) target = $region40
      $region39: #{_lambda_.7} parent=35 // pred_region
        %s490 = smul.u32 16, %s15
      $region40: #{_lambda_.7} parent=35 // pred_fallthru
        _
    $region36: #{_lambda_.7} parent=5 // pred_fallthru
      _
    %p491 = scmp.le.s32.totalorder 2, %s10
    // Predicated region
    $region41: #{_lambda_.7} parent=5 // pred_check
      %p492 = pneg %p491
    $region42: #{_lambda_.7} parent=5 // pred_check_branch
      %494 = sbr.rel (%p492) target = $region44
    $region43: #{_lambda_.7} parent=5 // pred_region
      %s495 = ssub.s32 %s10, 2
      // Predicated region
      $region45: #{_lambda_.7} parent=43 // pred_check
        %p496 = pneg %p128
      $region46: #{_lambda_.7} parent=43 // pred_check_branch
        %498 = sbr.rel (%p496) target = $region48
      $region47: #{_lambda_.7} parent=43 // pred_region
        %s499 = smul.u32 16, %s16
        %p500 = scmp.lt.s32.totalorder %s499, 63
        %s501 = scalar_select %p500, %s499, 63
        %s502 = smul.addr %s501, 4
        %s503 = scalar_lea.vmem %s4, %s502
      $region48: #{_lambda_.7} parent=43 // pred_fallthru
        _
    $region44: #{_lambda_.7} parent=5 // pred_fallthru
      _
  $region6: #{_lambda_.7} parent=0 // loop_footer
    %s14 = sadd.s32 1, %s10
  $region7: #{_lambda_.7} parent=0 // loop_footer_branch
    %9 = sbr.rel target = $region3
  $region8: #{_lambda_.7} parent=0 // loop_exit
    _

// kernel: _lambda_.11
$region0: #{_lambda_.11}
  #allocation0 [shape = 'u32[]', space=smem, size = 0x4, offset = 0x4, fixed_abs, tag = 'smem constant byte address 0x4 - core index']
  #allocation1 [shape = 'u32[72,128]{1,0:T(1,128)}', space=vmem, size = 0x9000, scoped, tag = 'internal scratch']
  %s0 = inlined_call_operand.vmem [shape: bf16[512,128], index: 0, kind: input, shape index: {}]
  %s1 = inlined_call_operand.vmem [shape: bf16[128,128], index: 1, kind: input, shape index: {}]
  %s2 = inlined_call_operand.vmem [shape: f32[8,128], index: 2, kind: input, shape index: {}]
  %s3 = inlined_call_operand.vmem [shape: f32[8,128], index: 3, kind: input, shape index: {}]
  %s4 = inlined_call_operand.vmem [shape: f32[512,128], index: 4, kind: input, shape index: {}]
  %s5 = inlined_call_operand.vmem [shape: f32[512,128], index: 5, kind: output, shape index: {}]
  %s6 = sld [smem:[#allocation0]]
  $region53: #{_lambda_.11} parent=0
    _
  %s8 = ssub.s32 1, %s6
  %s9 = scalar_select 0, %s8, %s6
  loop: start=0, step=1, limit=6
  $region2: #{_lambda_.11} parent=0 // loop_pre_header
    _
  $region3: #{_lambda_.11} parent=0 // loop_header
    %s11 = sphi 0, %s15
    %p12 = scmp.ge.s32.totalorder %s11, 6
    %s21 = sphi 0, %s23
    %s24 = sphi 0, %s21
    %s25 = sphi 0, %s24
    %s41 = sphi 0, %s25
    %s45 = sphi 0, %s45
    %s47 = sphi 0, %s45
    %s48 = sphi 0, %s47
    %s62 = sphi 0, %s48
    %s66 = sphi 0, %s66
    %s68 = sphi 0, %s66
    %s69 = sphi 0, %s68
    %s83 = sphi 0, %s69
    %s87 = sphi 0, %s87
    %s89 = sphi 0, %s87
    %s90 = sphi 0, %s89
    %s104 = sphi 0, %s90
    %s110 = sphi 0, %s112
    %s113 = sphi 0, %s110
    %s114 = sphi 0, %s113
    %s130 = sphi 0, %s114
    %s136 = sphi 0, %s138
    %s139 = sphi 0, %s136
    %s140 = sphi 0, %s139
    %s156 = sphi 0, %s140
  $region4: #{_lambda_.11} parent=0 // loop_header_branch
    %14 = sbr.rel (%p12) target = $region8
  $region5: #{_lambda_.11} parent=0 // loop_body
    %s16 = ssub.s32 %s11, 1
    %s17 = ssub.s32 %s11, 2
    %s18 = sadd.s32 %s11, 1
    %s19 = ssub.s32 %s11, %s18
    %p20 = scmp.eq.s32.totalorder %s19, 0
    %s22 = sadd.s32 %s21, 1
    %s23 = scalar_select %p20, %s21, %s22
    %p26 = pneg %p20
    %p27 = scmp.eq.s32.totalorder %s11, 3
    %p28 = por %p26, %p27
    %p29 = scmp.ne.s32.totalorder %s21, %s24
    %p30 = scmp.eq.s32.totalorder %s11, 0
    %p31 = por %p29, %p30
    %p32 = scmp.ne.s32.totalorder %s21, %s24
    %p33 = scmp.eq.s32.totalorder %s16, 3
    %p34 = por %p32, %p33
    %p35 = scmp.ne.s32.totalorder %s24, %s25
    %p36 = scmp.eq.s32.totalorder %s16, 0
    %p37 = por %p35, %p36
    %p38 = scmp.ne.s32.totalorder %s24, %s25
    %p39 = scmp.eq.s32.totalorder %s17, 3
    %p40 = por %p38, %p39
    %p42 = scmp.ne.s32.totalorder %s25, %s41
    %p43 = scmp.eq.s32.totalorder %s17, 0
    %p44 = por %p42, %p43
    %s46 = sadd.s32 %s45, 1
    %p49 = scmp.eq.s32.totalorder %s11, 3
    %p50 = scmp.ne.s32.totalorder %s45, %s47
    %p51 = scmp.eq.s32.totalorder %s11, 0
    %p52 = por %p50, %p51
    %p53 = scmp.ne.s32.totalorder %s45, %s47
    %p54 = scmp.eq.s32.totalorder %s16, 3
    %p55 = por %p53, %p54
    %p56 = scmp.ne.s32.totalorder %s47, %s48
    %p57 = scmp.eq.s32.totalorder %s16, 0
    %p58 = por %p56, %p57
    %p59 = scmp.ne.s32.totalorder %s47, %s48
    %p60 = scmp.eq.s32.totalorder %s17, 3
    %p61 = por %p59, %p60
    %p63 = scmp.ne.s32.totalorder %s48, %s62
    %p64 = scmp.eq.s32.totalorder %s17, 0
    %p65 = por %p63, %p64
    %s67 = sadd.s32 %s66, 1
    %p70 = scmp.eq.s32.totalorder %s11, 3
    %p71 = scmp.ne.s32.totalorder %s66, %s68
    %p72 = scmp.eq.s32.totalorder %s11, 0
    %p73 = por %p71, %p72
    %p74 = scmp.ne.s32.totalorder %s66, %s68
    %p75 = scmp.eq.s32.totalorder %s16, 3
    %p76 = por %p74, %p75
    %p77 = scmp.ne.s32.totalorder %s68, %s69
    %p78 = scmp.eq.s32.totalorder %s16, 0
    %p79 = por %p77, %p78
    %p80 = scmp.ne.s32.totalorder %s68, %s69
    %p81 = scmp.eq.s32.totalorder %s17, 3
    %p82 = por %p80, %p81
    %p84 = scmp.ne.s32.totalorder %s69, %s83
    %p85 = scmp.eq.s32.totalorder %s17, 0
    %p86 = por %p84, %p85
    %s88 = sadd.s32 %s87, 1
    %p91 = scmp.eq.s32.totalorder %s11, 3
    %p92 = scmp.ne.s32.totalorder %s87, %s89
    %p93 = scmp.eq.s32.totalorder %s11, 0
    %p94 = por %p92, %p93
    %p95 = scmp.ne.s32.totalorder %s87, %s89
    %p96 = scmp.eq.s32.totalorder %s16, 3
    %p97 = por %p95, %p96
    %p98 = scmp.ne.s32.totalorder %s89, %s90
    %p99 = scmp.eq.s32.totalorder %s16, 0
    %p100 = por %p98, %p99
    %p101 = scmp.ne.s32.totalorder %s89, %s90
    %p102 = scmp.eq.s32.totalorder %s17, 3
    %p103 = por %p101, %p102
    %p105 = scmp.ne.s32.totalorder %s90, %s104
    %p106 = scmp.eq.s32.totalorder %s17, 0
    %p107 = por %p105, %p106
    %s108 = ssub.s32 %s11, %s18
    %p109 = scmp.eq.s32.totalorder %s108, 0
    %s111 = sadd.s32 %s110, 1
    %s112 = scalar_select %p109, %s110, %s111
    %p115 = pneg %p109
    %p116 = scmp.eq.s32.totalorder %s11, 3
    %p117 = por %p115, %p116
    %p118 = scmp.ne.s32.totalorder %s110, %s113
    %p119 = scmp.eq.s32.totalorder %s11, 0
    %p120 = por %p118, %p119
    %p121 = scmp.ne.s32.totalorder %s110, %s113
    %p122 = scmp.eq.s32.totalorder %s16, 3
    %p123 = por %p121, %p122
    %p124 = scmp.ne.s32.totalorder %s113, %s114
    %p125 = scmp.eq.s32.totalorder %s16, 0
    %p126 = por %p124, %p125
    %p127 = scmp.ne.s32.totalorder %s113, %s114
    %p128 = scmp.eq.s32.totalorder %s17, 3
    %p129 = por %p127, %p128
    %p131 = scmp.ne.s32.totalorder %s114, %s130
    %p132 = scmp.eq.s32.totalorder %s17, 0
    %p133 = por %p131, %p132
    %s134 = ssub.s32 %s11, %s18
    %p135 = scmp.eq.s32.totalorder %s134, 0
    %s137 = sadd.s32 %s136, 1
    %s138 = scalar_select %p135, %s136, %s137
    %p141 = pneg %p135
    %p142 = scmp.eq.s32.totalorder %s11, 3
    %p143 = por %p141, %p142
    %p144 = scmp.ne.s32.totalorder %s136, %s139
    %p145 = scmp.eq.s32.totalorder %s11, 0
    %p146 = por %p144, %p145
    %p147 = scmp.ne.s32.totalorder %s136, %s139
    %p148 = scmp.eq.s32.totalorder %s16, 3
    %p149 = por %p147, %p148
    %p150 = scmp.ne.s32.totalorder %s139, %s140
    %p151 = scmp.eq.s32.totalorder %s16, 0
    %p152 = por %p150, %p151
    %p153 = scmp.ne.s32.totalorder %s139, %s140
    %p154 = scmp.eq.s32.totalorder %s17, 3
    %p155 = por %p153, %p154
    %p157 = scmp.ne.s32.totalorder %s140, %s156
    %p158 = scmp.eq.s32.totalorder %s17, 0
    %p159 = por %p157, %p158
    %p160 = scmp.le.s32.totalorder 1, %s11
    %p161 = scmp.lt.s32.totalorder %s11, 5
    %p162 = pnand %p160, %p161
    %p163 = pneg %p162
    // Predicated region
    $region9: #{_lambda_.11} parent=5 // pred_check
      _
    $region10: #{_lambda_.11} parent=5 // pred_check_branch
      %165 = sbr.rel (%p162) target = $region12
    $region11: #{_lambda_.11} parent=5 // pred_region
      %s166 = ssub.s32 %s11, 1
      // Predicated region
      $region13: #{_lambda_.11} parent=11 // pred_check
        %p167 = pneg %p58
      $region14: #{_lambda_.11} parent=11 // pred_check_branch
        %169 = sbr.rel (%p167) target = $region16
      $region15: #{_lambda_.11} parent=11 // pred_region
        _
      $region16: #{_lambda_.11} parent=11 // pred_fallthru
        _
      // Predicated region
      $region17: #{_lambda_.11} parent=11 // pred_check
        %p170 = pneg %p79
      $region18: #{_lambda_.11} parent=11 // pred_check_branch
        %172 = sbr.rel (%p170) target = $region20
      $region19: #{_lambda_.11} parent=11 // pred_region
        _
      $region20: #{_lambda_.11} parent=11 // pred_fallthru
        _
      // Predicated region
      $region21: #{_lambda_.11} parent=11 // pred_check
        %p173 = pneg %p100
      $region22: #{_lambda_.11} parent=11 // pred_check_branch
        %175 = sbr.rel (%p173) target = $region24
      $region23: #{_lambda_.11} parent=11 // pred_region
        _
      $region24: #{_lambda_.11} parent=11 // pred_fallthru
        _
    $region12: #{_lambda_.11} parent=5 // pred_fallthru
      _
    %p176 = scmp.lt.s32.totalorder %s11, 4
    // Predicated region
    $region25: #{_lambda_.11} parent=5 // pred_check
      %p177 = pneg %p176
    $region26: #{_lambda_.11} parent=5 // pred_check_branch
      %179 = sbr.rel (%p177) target = $region28
    $region27: #{_lambda_.11} parent=5 // pred_region
      // Predicated region
      $region29: #{_lambda_.11} parent=27 // pred_check
        %p180 = pneg %p31
      $region30: #{_lambda_.11} parent=27 // pred_check_branch
        %182 = sbr.rel (%p180) target = $region32
      $region31: #{_lambda_.11} parent=27 // pred_region
        %s183 = smul.u32 16, %s11
        %p184 = scmp.lt.s32.totalorder %s183, 63
        %s185 = scalar_select %p184, %s183, 63
        %s186 = smul.addr %s185, 4
        %s187 = scalar_lea.vmem %s0, %s186
        %s188 = smul.u32 16, %s11
      $region32: #{_lambda_.11} parent=27 // pred_fallthru
        _
      // Predicated region
      $region33: #{_lambda_.11} parent=27 // pred_check
        %p189 = pneg %p120
      $region34: #{_lambda_.11} parent=27 // pred_check_branch
        %191 = sbr.rel (%p189) target = $region36
      $region35: #{_lambda_.11} parent=27 // pred_region
        %s192 = smul.u32 16, %s11
        %p193 = scmp.lt.s32.totalorder %s192, 63
        %s194 = scalar_select %p193, %s192, 63
        %s195 = smul.addr %s194, 8
        %s196 = scalar_lea.vmem %s4, %s195
        %s197 = smul.u32 16, %s11
      $region36: #{_lambda_.11} parent=27 // pred_fallthru
        _
    $region28: #{_lambda_.11} parent=5 // pred_fallthru
      _
    %p198 = scmp.le.s32.totalorder 1, %s11
    %p199 = scmp.lt.s32.totalorder %s11, 5
    %p200 = pnand %p198, %p199
    %p201 = pneg %p200
    // Predicated region
    $region37: #{_lambda_.11} parent=5 // pred_check
      _
    $region38: #{_lambda_.11} parent=5 // pred_check_branch
      %203 = sbr.rel (%p200) target = $region40
    $region39: #{_lambda_.11} parent=5 // pred_region
      %s204 = ssub.s32 %s11, 1
      %s205 = smul.u32 16, %s16
      %p206 = scmp.lt.s32.totalorder %s205, 63
      %s207 = scalar_select %p206, %s205, 63
      %s208 = smul.addr %s207, 4
      %s209 = scalar_lea.vmem %s0, %s208
      %p210 = pneg %p37
      %p211 = pneg %p34
      %p212 = pneg %p58
      %p213 = pneg %p55
      %p214 = pneg %p79
      %p215 = pneg %p76
      %p216 = pneg %p100
      %p217 = pneg %p97
      %s218 = smul.u32 16, %s16
      %p219 = scmp.lt.s32.totalorder %s218, 63
      %s220 = scalar_select %p219, %s218, 63
      %s221 = smul.addr %s220, 8
      %s222 = scalar_lea.vmem %s4, %s221
      %p223 = pneg %p126
      %p224 = pneg %p123
      %p225 = pneg %p152
      %p226 = pneg %p149
      %s227 = smul.u32 16, %s16
      %p228 = scmp.lt.s32.totalorder %s227, 63
      %s229 = scalar_select %p228, %s227, 63
      %s230 = smul.addr %s229, 8
      %s231 = scalar_lea.vmem %s5, %s230
      %s232 = smul.u32 16, %s16
      %p233 = scmp.lt.s32.totalorder %s232, 63
      %s234 = scalar_select %p233, %s232, 63
      %s235 = smul.addr %s234, 4
      %s236 = scalar_lea.vmem %s0, %s235
      %s237 = smul.u32 16, %s16
      %s238 = smul.u32 16, %s16
      %p239 = scmp.lt.s32.totalorder %s238, 63
      %s240 = scalar_select %p239, %s238, 63
      %s241 = smul.addr %s240, 8
      %s242 = scalar_lea.vmem %s4, %s241
      %s243 = smul.u32 16, %s16
      %s244 = smul.u32 16, %s16
      %p245 = scmp.lt.s32.totalorder %s244, 63
      %s246 = scalar_select %p245, %s244, 63
      %s247 = smul.addr %s246, 8
      %s248 = scalar_lea.vmem %s5, %s247
      %s249 = smul.u32 16, %s16
      %v250 = vld [vmem:[%s236] sm:$0xf]
      %v251 = vld [vmem:[%s236 + $0x4] sm:$0xf]
      %v252 = vld [vmem:[%s236 + $0x8] sm:$0xf]
      %v253 = vld [vmem:[%s236 + $0xc] sm:$0xf]
      %v254 = vld [vmem:[%s236 + $0x10] sm:$0xf]
      %v255 = vld [vmem:[%s236 + $0x14] sm:$0xf]
      %v256 = vld [vmem:[%s236 + $0x18] sm:$0xf]
      %v257 = vld [vmem:[%s236 + $0x1c] sm:$0xf]
      %v258 = vld [vmem:[%s236 + $0x20] sm:$0xf]
      %v259 = vld [vmem:[%s236 + $0x24] sm:$0xf]
      %v260 = vld [vmem:[%s236 + $0x28] sm:$0xf]
      %v261 = vld [vmem:[%s236 + $0x2c] sm:$0xf]
      %v262 = vld [vmem:[%s236 + $0x30] sm:$0xf]
      %v263 = vld [vmem:[%s236 + $0x34] sm:$0xf]
      %v264 = vld [vmem:[%s236 + $0x38] sm:$0xf]
      %v265 = vld [vmem:[%s236 + $0x3c] sm:$0xf]
      %v266 = vld [vmem:[%s1] sm:$0xf]
      %v267 = vld [vmem:[%s1 + $0x4] sm:$0xf]
      %v268 = vld [vmem:[%s1 + $0x8] sm:$0xf]
      %v269 = vld [vmem:[%s1 + $0xc] sm:$0xf]
      %v270 = vld [vmem:[%s1 + $0x10] sm:$0xf]
      %v271 = vld [vmem:[%s1 + $0x14] sm:$0xf]
      %v272 = vld [vmem:[%s1 + $0x18] sm:$0xf]
      %v273 = vld [vmem:[%s1 + $0x1c] sm:$0xf]
      %v274 = vld [vmem:[%s1 + $0x20] sm:$0xf]
      %v275 = vld [vmem:[%s1 + $0x24] sm:$0xf]
      %v276 = vld [vmem:[%s1 + $0x28] sm:$0xf]
      %v277 = vld [vmem:[%s1 + $0x2c] sm:$0xf]
      %v278 = vld [vmem:[%s1 + $0x30] sm:$0xf]
      %v279 = vld [vmem:[%s1 + $0x34] sm:$0xf]
      %v280 = vld [vmem:[%s1 + $0x38] sm:$0xf]
      %v281 = vld [vmem:[%s1 + $0x3c] sm:$0xf]
      %v298 = vunpack.c.l.b16 %v250
      %v299 = vunpack.c.l.b16 %v251
      %v300 = vunpack.c.l.b16 %v252
      %v301 = vunpack.c.l.b16 %v253
      %v302 = vunpack.c.l.b16 %v254
      %v303 = vunpack.c.l.b16 %v255
      %v304 = vunpack.c.l.b16 %v256
      %v305 = vunpack.c.l.b16 %v257
      %v306 = vunpack.c.l.b16 %v258
      %v307 = vunpack.c.l.b16 %v259
      %v308 = vunpack.c.l.b16 %v260
      %v309 = vunpack.c.l.b16 %v261
      %v310 = vunpack.c.l.b16 %v262
      %v311 = vunpack.c.l.b16 %v263
      %v312 = vunpack.c.l.b16 %v264
      %v313 = vunpack.c.l.b16 %v265
      %v314 = vpack.c.b16 %v299, %v298
      %v315 = vpack.c.b16 %v301, %v300
      %v316 = vpack.c.b16 %v303, %v302
      %v317 = vpack.c.b16 %v305, %v304
      %v318 = vpack.c.b16 %v307, %v306
      %v319 = vpack.c.b16 %v309, %v308
      %v320 = vpack.c.b16 %v311, %v310
      %v321 = vpack.c.b16 %v313, %v312
      %v346 = vunpack.c.l.b16 %v266
      %v347 = vunpack.c.l.b16 %v267
      %v348 = vunpack.c.l.b16 %v268
      %v349 = vunpack.c.l.b16 %v269
      %v350 = vunpack.c.l.b16 %v270
      %v351 = vunpack.c.l.b16 %v271
      %v352 = vunpack.c.l.b16 %v272
      %v353 = vunpack.c.l.b16 %v273
      %v354 = vunpack.c.l.b16 %v274
      %v355 = vunpack.c.l.b16 %v275
      %v356 = vunpack.c.l.b16 %v276
      %v357 = vunpack.c.l.b16 %v277
      %v358 = vunpack.c.l.b16 %v278
      %v359 = vunpack.c.l.b16 %v279
      %v360 = vunpack.c.l.b16 %v280
      %v361 = vunpack.c.l.b16 %v281
      %v362 = vpack.c.b16 %v347, %v346
      %v363 = vpack.c.b16 %v349, %v348
      %v364 = vpack.c.b16 %v351, %v350
      %v365 = vpack.c.b16 %v353, %v352
      %v366 = vpack.c.b16 %v355, %v354
      %v367 = vpack.c.b16 %v357, %v356
      %v368 = vpack.c.b16 %v359, %v358
      %v369 = vpack.c.b16 %v361, %v360
      %378 = vmatpush.bf16.msra.mxu0 %v369
      %379 = vmatpush.bf16.msra.mxu0 %v368
      %380 = vmatpush.bf16.msra.mxu0 %v367
      %381 = vmatpush.bf16.msra.mxu0 %v366
      %382 = vmatpush.bf16.msra.mxu0 %v365
      %383 = vmatpush.bf16.msra.mxu0 %v364
      %384 = vmatpush.bf16.msra.mxu0 %v363
      %385 = vmatpush.bf16.msra.mxu0 %v362
      %386 = vmatmul.bf16.gmra.mxu0 %v314
      %v387 = vpop.f32.mrf.mxu0
      %v388 = vadd.f32 0.0, %v387
      %v389 = vpop.f32.mrf.mxu0
      %v390 = vadd.f32 0.0, %v389
      %391 = vmatmul.bf16.gmra.mxu0 %v315
      %v392 = vpop.f32.mrf.mxu0
      %v393 = vadd.f32 0.0, %v392
      %v394 = vpop.f32.mrf.mxu0
      %v395 = vadd.f32 0.0, %v394
      %396 = vmatmul.bf16.gmra.mxu0 %v316
      %v397 = vpop.f32.mrf.mxu0
      %v398 = vadd.f32 0.0, %v397
      %v399 = vpop.f32.mrf.mxu0
      %v400 = vadd.f32 0.0, %v399
      %401 = vmatmul.bf16.gmra.mxu0 %v317
      %v402 = vpop.f32.mrf.mxu0
      %v403 = vadd.f32 0.0, %v402
      %v404 = vpop.f32.mrf.mxu0
      %v405 = vadd.f32 0.0, %v404
      %406 = vmatmul.bf16.gmra.mxu0 %v318
      %v407 = vpop.f32.mrf.mxu0
      %v408 = vadd.f32 0.0, %v407
      %v409 = vpop.f32.mrf.mxu0
      %v410 = vadd.f32 0.0, %v409
      %411 = vmatmul.bf16.gmra.mxu0 %v319
      %v412 = vpop.f32.mrf.mxu0
      %v413 = vadd.f32 0.0, %v412
      %v414 = vpop.f32.mrf.mxu0
      %v415 = vadd.f32 0.0, %v414
      %416 = vmatmul.bf16.gmra.mxu0 %v320
      %v417 = vpop.f32.mrf.mxu0
      %v418 = vadd.f32 0.0, %v417
      %v419 = vpop.f32.mrf.mxu0
      %v420 = vadd.f32 0.0, %v419
      %421 = vmatmul.bf16.gmra.mxu0 %v321
      %v422 = vpop.f32.mrf.mxu0
      %v423 = vadd.f32 0.0, %v422
      %v424 = vpop.f32.mrf.mxu0
      %v425 = vadd.f32 0.0, %v424
      %426 = vdwg.mxu0
      %v427 = vld [vmem:[%s2] sm:$0x1]
      %v428 = vmul.f32 %v427, 0.001953125
      %v429 = vld [vmem:[%s2 + $0x1] sm:$0x1]
      %v430 = vmul.f32 %v429, 0.001953125
      %v431 = vmul.f32 %v428, %v428
      %v432 = vsub.f32 %v430, %v431
      %v433 = vadd.f32 %v432, 1e-05
      %v434 = vrsqrt.pop %v433
      %v435 = vmul.f32 %v434, %v433
      %v436 = vmul.f32 %v435, %v434
      %v437 = vmul.f32 0.5, %v436
      %v438 = vsub.f32 1.5, %v437
      %v439 = vmul.f32 %v434, %v438
      %vm440 = vweird.f32 %v433
      %vm441 = vweird.f32 %v434
      %vm442 = vmor %vm440, %vm441
      %v443 = vsel %vm442, %v434, %v439
      %v444 = vld [vmem:[%s3] sm:$0x1]
      %v445 = vmul.f32 %v444, %v443
      %v446 = vld [vmem:[%s3 + $0x1] sm:$0x1]
      %v447 = vmul.f32 %v428, %v445
      %v448 = vsub.f32 %v446, %v447
      %v449 = vperm.slane %v445, 0
      %v450 = vmul.f32 %v388, %v449
      %v451 = vmul.f32 %v390, %v449
      %v452 = vmul.f32 %v393, %v449
      %v453 = vmul.f32 %v395, %v449
      %v454 = vmul.f32 %v398, %v449
      %v455 = vmul.f32 %v400, %v449
      %v456 = vmul.f32 %v403, %v449
      %v457 = vmul.f32 %v405, %v449
      %v458 = vmul.f32 %v408, %v449
      %v459 = vmul.f32 %v410, %v449
      %v460 = vmul.f32 %v413, %v449
      %v461 = vmul.f32 %v415, %v449
      %v462 = vmul.f32 %v418, %v449
      %v463 = vmul.f32 %v420, %v449
      %v464 = vmul.f32 %v423, %v449
      %v465 = vmul.f32 %v425, %v449
      %v466 = vperm.slane %v448, 0
      %v467 = vadd.f32 %v450, %v466
      %v468 = vadd.f32 %v451, %v466
      %v469 = vadd.f32 %v452, %v466
      %v470 = vadd.f32 %v453, %v466
      %v471 = vadd.f32 %v454, %v466
      %v472 = vadd.f32 %v455, %v466
      %v473 = vadd.f32 %v456, %v466
      %v474 = vadd.f32 %v457, %v466
      %v475 = vadd.f32 %v458, %v466
      %v476 = vadd.f32 %v459, %v466
      %v477 = vadd.f32 %v460, %v466
      %v478 = vadd.f32 %v461, %v466
      %v479 = vadd.f32 %v462, %v466
      %v480 = vadd.f32 %v463, %v466
      %v481 = vadd.f32 %v464, %v466
      %v482 = vadd.f32 %v465, %v466
      %v483 = vld [vmem:[%s242] sm:$0xff]
      %v484 = vld [vmem:[%s242 + $0x8] sm:$0xff]
      %v485 = vld [vmem:[%s242 + $0x10] sm:$0xff]
      %v486 = vld [vmem:[%s242 + $0x18] sm:$0xff]
      %v487 = vld [vmem:[%s242 + $0x20] sm:$0xff]
      %v488 = vld [vmem:[%s242 + $0x28] sm:$0xff]
      %v489 = vld [vmem:[%s242 + $0x30] sm:$0xff]
      %v490 = vld [vmem:[%s242 + $0x38] sm:$0xff]
      %v491 = vld [vmem:[%s242 + $0x40] sm:$0xff]
      %v492 = vld [vmem:[%s242 + $0x48] sm:$0xff]
      %v493 = vld [vmem:[%s242 + $0x50] sm:$0xff]
      %v494 = vld [vmem:[%s242 + $0x58] sm:$0xff]
      %v495 = vld [vmem:[%s242 + $0x60] sm:$0xff]
      %v496 = vld [vmem:[%s242 + $0x68] sm:$0xff]
      %v497 = vld [vmem:[%s242 + $0x70] sm:$0xff]
      %v498 = vld [vmem:[%s242 + $0x78] sm:$0xff]
      %v499 = vadd.f32 %v467, %v483
      %v500 = vadd.f32 %v468, %v484
      %v501 = vadd.f32 %v469, %v485
      %v502 = vadd.f32 %v470, %v486
      %v503 = vadd.f32 %v471, %v487
      %v504 = vadd.f32 %v472, %v488
      %v505 = vadd.f32 %v473, %v489
      %v506 = vadd.f32 %v474, %v490
      %v507 = vadd.f32 %v475, %v491
      %v508 = vadd.f32 %v476, %v492
      %v509 = vadd.f32 %v477, %v493
      %v510 = vadd.f32 %v478, %v494
      %v511 = vadd.f32 %v479, %v495
      %v512 = vadd.f32 %v480, %v496
      %v513 = vadd.f32 %v481, %v497
      %v514 = vadd.f32 %v482, %v498
      %v515 = vmax.f32 %v499, 0.0
      %v516 = vmax.f32 %v500, 0.0
      %v517 = vmax.f32 %v501, 0.0
      %v518 = vmax.f32 %v502, 0.0
      %v519 = vmax.f32 %v503, 0.0
      %v520 = vmax.f32 %v504, 0.0
      %v521 = vmax.f32 %v505, 0.0
      %v522 = vmax.f32 %v506, 0.0
      %v523 = vmax.f32 %v507, 0.0
      %v524 = vmax.f32 %v508, 0.0
      %v525 = vmax.f32 %v509, 0.0
      %v526 = vmax.f32 %v510, 0.0
      %v527 = vmax.f32 %v511, 0.0
      %v528 = vmax.f32 %v512, 0.0
      %v529 = vmax.f32 %v513, 0.0
      %v530 = vmax.f32 %v514, 0.0
      %531 = vst [vmem:[%s248] sm:$0xff] %v515
      %532 = vst [vmem:[%s248 + $0x8] sm:$0xff] %v516
      %533 = vst [vmem:[%s248 + $0x10] sm:$0xff] %v517
      %534 = vst [vmem:[%s248 + $0x18] sm:$0xff] %v518
      %535 = vst [vmem:[%s248 + $0x20] sm:$0xff] %v519
      %536 = vst [vmem:[%s248 + $0x28] sm:$0xff] %v520
      %537 = vst [vmem:[%s248 + $0x30] sm:$0xff] %v521
      %538 = vst [vmem:[%s248 + $0x38] sm:$0xff] %v522
      %539 = vst [vmem:[%s248 + $0x40] sm:$0xff] %v523
      %540 = vst [vmem:[%s248 + $0x48] sm:$0xff] %v524
      %541 = vst [vmem:[%s248 + $0x50] sm:$0xff] %v525
      %542 = vst [vmem:[%s248 + $0x58] sm:$0xff] %v526
      %543 = vst [vmem:[%s248 + $0x60] sm:$0xff] %v527
      %544 = vst [vmem:[%s248 + $0x68] sm:$0xff] %v528
      %545 = vst [vmem:[%s248 + $0x70] sm:$0xff] %v529
      %546 = vst [vmem:[%s248 + $0x78] sm:$0xff] %v530
      %s547 = smul.u32 16, %s16
      %p548 = scmp.lt.s32.totalorder %s547, 63
      %s549 = scalar_select %p548, %s547, 63
      %s550 = smul.addr %s549, 8
      %s551 = scalar_lea.vmem %s5, %s550
      // Predicated region
      $region41: #{_lambda_.11} parent=39 // pred_check
        %p552 = pneg %p149
      $region42: #{_lambda_.11} parent=39 // pred_check_branch
        %554 = sbr.rel (%p552) target = $region44
      $region43: #{_lambda_.11} parent=39 // pred_region
        %s555 = smul.u32 16, %s16
      $region44: #{_lambda_.11} parent=39 // pred_fallthru
        _
    $region40: #{_lambda_.11} parent=5 // pred_fallthru
      _
    %p556 = scmp.le.s32.totalorder 2, %s11
    // Predicated region
    $region45: #{_lambda_.11} parent=5 // pred_check
      %p557 = pneg %p556
    $region46: #{_lambda_.11} parent=5 // pred_check_branch
      %559 = sbr.rel (%p557) target = $region48
    $region47: #{_lambda_.11} parent=5 // pred_region
      %s560 = ssub.s32 %s11, 2
      // Predicated region
      $region49: #{_lambda_.11} parent=47 // pred_check
        %p561 = pneg %p155
      $region50: #{_lambda_.11} parent=47 // pred_check_branch
        %563 = sbr.rel (%p561) target = $region52
      $region51: #{_lambda_.11} parent=47 // pred_region
        %s564 = smul.u32 16, %s17
        %p565 = scmp.lt.s32.totalorder %s564, 63
        %s566 = scalar_select %p565, %s564, 63
        %s567 = smul.addr %s566, 8
        %s568 = scalar_lea.vmem %s5, %s567
      $region52: #{_lambda_.11} parent=47 // pred_fallthru
        _
    $region48: #{_lambda_.11} parent=5 // pred_fallthru
      _
  $region6: #{_lambda_.11} parent=0 // loop_footer
    %s15 = sadd.s32 1, %s11
  $region7: #{_lambda_.11} parent=0 // loop_footer_branch
    %10 = sbr.rel target = $region3
  $region8: #{_lambda_.11} parent=0 // loop_exit
    _

</llo_original>
